<compile_context>
chip_gen: v5e
topology: v5e:2x2
jax: 0.10.0
libtpu: 0.0.40
codegen_flags: <defaults>
</compile_context>

<pallas_src>
import functools
import math

import jax
import jax.numpy as jnp
from jax.experimental import pallas as pl
from jax.experimental.pallas import tpu as pltpu


def _layernorm(x, gamma, beta, eps=1e-5):
    # x: (L, E) f32, gamma/beta: (1, E) f32   (PyTorch LayerNorm, eps=1e-5)
    mu = jnp.mean(x, axis=-1, keepdims=True)
    var = jnp.mean((x - mu) ** 2, axis=-1, keepdims=True)
    return (x - mu) * jax.lax.rsqrt(var + eps) * gamma + beta


def encoder_layer_kernel(x_ref,       # (L, E)   one batch element, f32
                         wqkv_ref,    # (E, 3E)  fused in_proj.weight.T, bf16 (q cols pre-scaled)
                         bqkv_ref,    # (1, 3E)  f32 (q part pre-scaled)
                         wo_ref,      # (E, E)   out_proj.weight.T, bf16
                         bo_ref,      # (1, E)   f32
                         g1_ref,      # (1, E)   norm1.weight
                         be1_ref,     # (1, E)   norm1.bias
                         w1_ref,      # (E, F)   ffn[0].weight.T, bf16
                         b1_ref,      # (1, F)
                         w2_ref,      # (F, E)   ffn[2].weight.T, bf16
                         b2_ref,      # (1, E)
                         g2_ref,      # (1, E)   norm2.weight
                         be2_ref,     # (1, E)   norm2.bias
                         o_ref,       # (L, E)   output
                         *, num_heads):
    L, E = x_ref.shape
    H = num_heads
    hd = E // H

    x_f32 = x_ref[...]
    x_bf = x_f32.astype(jnp.bfloat16)          # single cast per batch element

    # ---- fused QKV projection: one lane-dense (L,E)@(E,3E) MXU matmul ----
    # The 1/sqrt(head_dim) softmax scale is already folded into the q slice of
    # wqkv/bqkv (prepare_kernel_params), so no (L,L) score scaling below.
    qkv = jnp.dot(x_bf, wqkv_ref[...], preferred_element_type=jnp.float32)
    qkv = qkv + bqkv_ref[...]

    def to_heads(t):                           # (L, H*hd) -> (H, L, hd)
        return jnp.transpose(t.reshape(L, H, hd), (1, 0, 2))

    q = to_heads(qkv[:, :E]).astype(jnp.bfloat16)
    k = to_heads(qkv[:, E:2 * E]).astype(jnp.bfloat16)
    v = to_heads(qkv[:, 2 * E:]).astype(jnp.bfloat16)

    # ---- attention, batched over heads; softmax statistics kept in f32 ----
    s = jnp.einsum("hqd,hkd->hqk", q, k, preferred_element_type=jnp.float32)
    s = s - jnp.max(s, axis=-1, keepdims=True)
    p = jnp.exp(s)
    p = p * pl.reciprocal(jnp.sum(p, axis=-1, keepdims=True), approx=True)

    ctx = jnp.einsum("hqk,hkd->hqd", p.astype(jnp.bfloat16), v,
                     preferred_element_type=jnp.float32)          # (H, L, hd)
    ctx = jnp.transpose(ctx, (1, 0, 2)).reshape(L, E)             # concat heads

    # ---- single (L,E)@(E,E) output projection (K = E, not K = hd) ----
    attn = jnp.dot(ctx.astype(jnp.bfloat16), wo_ref[...],
                   preferred_element_type=jnp.float32) + bo_ref[...]

    # ---- residual + LayerNorm 1 (dropout = identity: inference mode) ----
    x1 = _layernorm(x_f32 + attn, g1_ref[...], be1_ref[...])

    # ---- FFN: Linear -> ReLU -> Linear ----
    h1 = jnp.dot(x1.astype(jnp.bfloat16), w1_ref[...],
                 preferred_element_type=jnp.float32) + b1_ref[...]
    h1 = jnp.maximum(h1, 0.0)
    y = jnp.dot(h1.astype(jnp.bfloat16), w2_ref[...],
                preferred_element_type=jnp.float32) + b2_ref[...]

    # ---- residual + LayerNorm 2 ----
    o_ref[...] = _layernorm(x1 + y, g2_ref[...], be2_ref[...]).astype(o_ref.dtype)


def _vmem_limit_bytes():
    """Generation-aware VMEM budget (leave headroom on v7x's 64 MiB/TC)."""
    try:
        phys = pltpu.get_tpu_info().vmem_capacity_bytes
    except Exception:
        phys = 128 * 1024 * 1024
    return int(min(64 * 1024 * 1024, phys * 3 // 4))


def transformer_encoder_layer(x_nle, kparams, num_heads):
    """x_nle: (N, L, E) float32, batch-first (zero-transpose path)."""
    N, L, E = x_nle.shape
    assert E % num_heads == 0, "embed_dim must be divisible by num_heads"
    F = kparams["w1"].shape[1]

    w2d = lambda shape: pl.BlockSpec(shape, lambda b: (0, 0))  # grid-invariant: DMA'd once

    out = pl.pallas_call(
        functools.partial(encoder_layer_kernel, num_heads=num_heads),
        out_shape=jax.ShapeDtypeStruct((N, L, E), jnp.float32),
        grid=(N,),
        in_specs=[
            pl.BlockSpec((None, L, E), lambda b: (b, 0, 0)),   # x, batch dim squeezed
            w2d((E, 3 * E)),                                   # wqkv
            w2d((1, 3 * E)),                                   # bqkv
            w2d((E, E)),                                       # wo
            w2d((1, E)),                                       # bo
            w2d((1, E)), w2d((1, E)),                          # gamma1, beta1
            w2d((E, F)), w2d((1, F)),                          # w1, b1
            w2d((F, E)), w2d((1, E)),                          # w2, b2
            w2d((1, E)), w2d((1, E)),                          # gamma2, beta2
        ],
        out_specs=pl.BlockSpec((None, L, E), lambda b: (b, 0, 0)),
        compiler_params=pltpu.CompilerParams(
            dimension_semantics=("parallel",),
            vmem_limit_bytes=_vmem_limit_bytes(),
        ),
    )(
        x_nle,
        kparams["wqkv"], kparams["bqkv"],
        kparams["wo"], kparams["bo"],
        kparams["g1"], kparams["be1"],
        kparams["w1"], kparams["b1"],
        kparams["w2"], kparams["b2"],
        kparams["g2"], kparams["be2"],
    )
    return out


def transformer_encoder_layer_seq_first(x_lne, kparams, num_heads):
    """Drop-in for PyTorch's default (L, N, E) layout (pays one transpose each way)."""
    out = transformer_encoder_layer(jnp.transpose(x_lne, (1, 0, 2)), kparams, num_heads)
    return jnp.transpose(out, (1, 0, 2))


def init_torch_like_params(key, embed_dim, ff_dim):
    """Parameters in PyTorch's native shapes/semantics (Linear: y = x @ W.T + b)."""
    E, F = embed_dim, ff_dim
    ks = jax.random.split(key, 8)
    s = 0.02
    return {
        "in_proj_weight":  s * jax.random.normal(ks[0], (3 * E, E), jnp.float32),
        "in_proj_bias":    s * jax.random.normal(ks[1], (3 * E,), jnp.float32),
        "out_proj_weight": s * jax.random.normal(ks[2], (E, E), jnp.float32),
        "out_proj_bias":   s * jax.random.normal(ks[3], (E,), jnp.float32),
        "norm1_weight": jnp.ones((E,), jnp.float32),
        "norm1_bias":   jnp.zeros((E,), jnp.float32),
        "ffn_w1": s * jax.random.normal(ks[4], (F, E), jnp.float32),
        "ffn_b1": s * jax.random.normal(ks[5], (F,), jnp.float32),
        "ffn_w2": s * jax.random.normal(ks[6], (E, F), jnp.float32),
        "ffn_b2": s * jax.random.normal(ks[7], (E,), jnp.float32),
        "norm2_weight": jnp.ones((E,), jnp.float32),
        "norm2_bias":   jnp.zeros((E,), jnp.float32),
    }


def prepare_kernel_params(p, num_heads):
    """One-time: fuse QKV, fold softmax scale into q, pre-transpose, cast to bf16."""
    E = p["out_proj_weight"].shape[0]
    F = p["ffn_w1"].shape[0]
    hd = E // num_heads
    scale = 1.0 / math.sqrt(hd)

    # Fused in-projection: columns ordered [q | k | v]; scale the q columns
    # (weight AND bias — PyTorch scales q after adding the bias, equivalent).
    wqkv = jnp.transpose(p["in_proj_weight"], (1, 0))            # (E, 3E)
    bqkv = p["in_proj_bias"].reshape(1, 3 * E)
    col_scale = jnp.concatenate(
        [jnp.full((E,), scale, jnp.float32), jnp.ones((2 * E,), jnp.float32)])
    wqkv = (wqkv * col_scale[None, :]).astype(jnp.bfloat16)
    bqkv = (bqkv * col_scale[None, :]).astype(jnp.float32)

    return {
        "wqkv": wqkv, "bqkv": bqkv,
        "wo": jnp.transpose(p["out_proj_weight"], (1, 0)).astype(jnp.bfloat16),  # (E, E)
        "bo": p["out_proj_bias"].reshape(1, E).astype(jnp.float32),
        "g1": p["norm1_weight"].reshape(1, E).astype(jnp.float32),
        "be1": p["norm1_bias"].reshape(1, E).astype(jnp.float32),
        "w1": jnp.transpose(p["ffn_w1"], (1, 0)).astype(jnp.bfloat16),           # (E, F)
        "b1": p["ffn_b1"].reshape(1, F).astype(jnp.float32),
        "w2": jnp.transpose(p["ffn_w2"], (1, 0)).astype(jnp.bfloat16),           # (F, E)
        "b2": p["ffn_b2"].reshape(1, E).astype(jnp.float32),
        "g2": p["norm2_weight"].reshape(1, E).astype(jnp.float32),
        "be2": p["norm2_bias"].reshape(1, E).astype(jnp.float32),
    }


def reference_encoder_layer(x, p, num_heads):
    """Pure-JAX f32 reference (PyTorch TransformerEncoderLayer in eval mode), batch-first."""
    N, L, E = x.shape
    H = num_heads
    hd = E // H
    wq, wk, wv = jnp.split(p["in_proj_weight"], 3, axis=0)
    bq, bk, bv = jnp.split(p["in_proj_bias"], 3)
    q = (x @ wq.T + bq).reshape(N, L, H, hd)
    k = (x @ wk.T + bk).reshape(N, L, H, hd)
    v = (x @ wv.T + bv).reshape(N, L, H, hd)
    s = jnp.einsum("nqhd,nkhd->nhqk", q, k) / jnp.sqrt(jnp.float32(hd))
    a = jax.nn.softmax(s, axis=-1)
    ctx = jnp.einsum("nhqk,nkhd->nqhd", a, v).reshape(N, L, E)
    attn = ctx @ p["out_proj_weight"].T + p["out_proj_bias"]

    def ln(t, g, b):
        mu = jnp.mean(t, -1, keepdims=True)
        var = jnp.mean((t - mu) ** 2, -1, keepdims=True)
        return (t - mu) * jax.lax.rsqrt(var + 1e-5) * g + b

    x1 = ln(x + attn, p["norm1_weight"], p["norm1_bias"])
    h1 = jax.nn.relu(x1 @ p["ffn_w1"].T + p["ffn_b1"])
    y = h1 @ p["ffn_w2"].T + p["ffn_b2"]
    return ln(x1 + y, p["norm2_weight"], p["norm2_bias"])


if __name__ == "__main__":
    # Small shapes: batch=2, seq=8, embed_dim=32, heads=4, ff_dim=64.
    N, L, E, H, F = 2, 8, 32, 4, 64
    key = jax.random.PRNGKey(0)
    kx, kp = jax.random.split(key)

    # Batch-first (N, L, E): zero-transpose path (perf feedback).  PyTorch's
    # seq-first (L, N, E) maps onto this via transformer_encoder_layer_seq_first.
    x = jax.random.normal(kx, (N, L, E), jnp.float32)

    torch_params = init_torch_like_params(kp, E, F)
    kparams = prepare_kernel_params(torch_params, num_heads=H)

    out = transformer_encoder_layer(x, kparams, num_heads=H)
    out = jax.block_until_ready(out)

    ref = reference_encoder_layer(x, torch_params, num_heads=H)
    assert out.shape == (N, L, E)
    assert jnp.all(jnp.isfinite(out))
    # bf16 weights + approx reciprocal -> bf16-class tolerance vs f32 reference.
    assert jnp.allclose(out, ref, rtol=5e-2, atol=5e-2), \
        float(jnp.max(jnp.abs(out - ref)))
    print("KERNEL_OK")
</pallas_src>

<mosaic_0001>
module attributes {stable_mosaic.version = 11 : i64} {
  func.func @encoder_layer_kernel(%arg0: i32, %arg1: memref<1x8x32xf32, #tpu.memory_space<vmem>>, %arg2: memref<32x96xbf16, #tpu.memory_space<vmem>>, %arg3: memref<1x96xf32, #tpu.memory_space<vmem>>, %arg4: memref<32x32xbf16, #tpu.memory_space<vmem>>, %arg5: memref<1x32xf32, #tpu.memory_space<vmem>>, %arg6: memref<1x32xf32, #tpu.memory_space<vmem>>, %arg7: memref<1x32xf32, #tpu.memory_space<vmem>>, %arg8: memref<32x64xbf16, #tpu.memory_space<vmem>>, %arg9: memref<1x64xf32, #tpu.memory_space<vmem>>, %arg10: memref<64x32xbf16, #tpu.memory_space<vmem>>, %arg11: memref<1x32xf32, #tpu.memory_space<vmem>>, %arg12: memref<1x32xf32, #tpu.memory_space<vmem>>, %arg13: memref<1x32xf32, #tpu.memory_space<vmem>>, %arg14: memref<1x8x32xf32, #tpu.memory_space<vmem>>) attributes {dimension_semantics = [#tpu.dimension_semantics<parallel>], iteration_bounds = array<i64: 2>, scalar_prefetch = 0 : i64, scratch_operands = 0 : i64, tpu.core_type = #tpu.core_type<tc>, window_params = [{transform_indices = @transform_0, window_bounds = array<i64: 1, 8, 32>}, {pipeline_mode = #tpu.pipeline_mode<synchronous>, transform_indices = @transform_1, window_bounds = array<i64: 32, 96>}, {pipeline_mode = #tpu.pipeline_mode<synchronous>, transform_indices = @transform_2, window_bounds = array<i64: 1, 96>}, {pipeline_mode = #tpu.pipeline_mode<synchronous>, transform_indices = @transform_3, window_bounds = array<i64: 32, 32>}, {pipeline_mode = #tpu.pipeline_mode<synchronous>, transform_indices = @transform_4, window_bounds = array<i64: 1, 32>}, {pipeline_mode = #tpu.pipeline_mode<synchronous>, transform_indices = @transform_5, window_bounds = array<i64: 1, 32>}, {pipeline_mode = #tpu.pipeline_mode<synchronous>, transform_indices = @transform_6, window_bounds = array<i64: 1, 32>}, {pipeline_mode = #tpu.pipeline_mode<synchronous>, transform_indices = @transform_7, window_bounds = array<i64: 32, 64>}, {pipeline_mode = #tpu.pipeline_mode<synchronous>, transform_indices = @transform_8, window_bounds = array<i64: 1, 64>}, {pipeline_mode = #tpu.pipeline_mode<synchronous>, transform_indices = @transform_9, window_bounds = array<i64: 64, 32>}, {pipeline_mode = #tpu.pipeline_mode<synchronous>, transform_indices = @transform_10, window_bounds = array<i64: 1, 32>}, {pipeline_mode = #tpu.pipeline_mode<synchronous>, transform_indices = @transform_11, window_bounds = array<i64: 1, 32>}, {pipeline_mode = #tpu.pipeline_mode<synchronous>, transform_indices = @transform_12, window_bounds = array<i64: 1, 32>}, {transform_indices = @transform_13, window_bounds = array<i64: 1, 8, 32>}]} {
    %c0 = arith.constant 0 : index
    %c0_0 = arith.constant 0 : index
    %c0_1 = arith.constant 0 : index
    %0 = vector.load %arg1[%c0, %c0_0, %c0_1] : memref<1x8x32xf32, #tpu.memory_space<vmem>>, vector<1x8x32xf32>
    %1 = vector.shape_cast %0 : vector<1x8x32xf32> to vector<8x32xf32>
    %2 = arith.truncf %1 : vector<8x32xf32> to vector<8x32xbf16>
    %c0_2 = arith.constant 0 : index
    %c0_3 = arith.constant 0 : index
    %3 = vector.load %arg2[%c0_2, %c0_3] : memref<32x96xbf16, #tpu.memory_space<vmem>>, vector<32x96xbf16>
    %cst = arith.constant dense<0.000000e+00> : vector<8x96xf32>
    %4 = tpu.matmul %2, %3, %cst {dimension_numbers = #tpu.dot_dimension_numbers<[1], [0], [0], [1], [0, 0, 1, 1], [], []>} : vector<8x32xbf16>, vector<32x96xbf16>, vector<8x96xf32> -> vector<8x96xf32>
    %c0_4 = arith.constant 0 : index
    %c0_5 = arith.constant 0 : index
    %5 = vector.load %arg3[%c0_4, %c0_5] : memref<1x96xf32, #tpu.memory_space<vmem>>, vector<1x96xf32>
    %6 = vector.broadcast %5 : vector<1x96xf32> to vector<8x96xf32>
    %7 = arith.addf %4, %6 : vector<8x96xf32>
    %8 = vector.extract_strided_slice %7 {offsets = [0, 0], sizes = [8, 32], strides = [1, 1]} : vector<8x96xf32> to vector<8x32xf32>
    %9 = vector.shape_cast %8 : vector<8x32xf32> to vector<8x4x8xf32>
    %10 = tpu.transpose %9, [1, 0, 2] : vector<8x4x8xf32> -> vector<4x8x8xf32>
    %11 = arith.truncf %10 : vector<4x8x8xf32> to vector<4x8x8xbf16>
    %12 = vector.extract_strided_slice %7 {offsets = [0, 32], sizes = [8, 32], strides = [1, 1]} : vector<8x96xf32> to vector<8x32xf32>
    %13 = vector.shape_cast %12 : vector<8x32xf32> to vector<8x4x8xf32>
    %14 = tpu.transpose %13, [1, 0, 2] : vector<8x4x8xf32> -> vector<4x8x8xf32>
    %15 = arith.truncf %14 : vector<4x8x8xf32> to vector<4x8x8xbf16>
    %16 = vector.extract_strided_slice %7 {offsets = [0, 64], sizes = [8, 32], strides = [1, 1]} : vector<8x96xf32> to vector<8x32xf32>
    %17 = vector.shape_cast %16 : vector<8x32xf32> to vector<8x4x8xf32>
    %18 = tpu.transpose %17, [1, 0, 2] : vector<8x4x8xf32> -> vector<4x8x8xf32>
    %19 = arith.truncf %18 : vector<4x8x8xf32> to vector<4x8x8xbf16>
    "tpu.trace_start"() <{level = 10 : i32, message = "hqd,hkd->hqk"}> : () -> ()
    %cst_6 = arith.constant dense<0.000000e+00> : vector<4x8x8xf32>
    %20 = tpu.matmul %11, %15, %cst_6 {dimension_numbers = #tpu.dot_dimension_numbers<[2], [2], [1], [1], [0, 0, 0, 1, 1, 1], [0], [0]>} : vector<4x8x8xbf16>, vector<4x8x8xbf16>, vector<4x8x8xf32> -> vector<4x8x8xf32>
    "tpu.trace_stop"() : () -> ()
    %cst_7 = arith.constant dense<0xFF800000> : vector<4x8xf32>
    %21 = vector.multi_reduction <maximumf>, %20, %cst_7 [2] : vector<4x8x8xf32> to vector<4x8xf32>
    %22 = vector.shape_cast %21 : vector<4x8xf32> to vector<4x8x1xf32>
    %23 = vector.broadcast %22 : vector<4x8x1xf32> to vector<4x8x8xf32>
    %24 = arith.subf %20, %23 : vector<4x8x8xf32>
    %25 = math.exp %24 : vector<4x8x8xf32>
    %cst_8 = arith.constant dense<0.000000e+00> : vector<4x8xf32>
    %26 = vector.multi_reduction <add>, %25, %cst_8 [2] : vector<4x8x8xf32> to vector<4x8xf32>
    %27 = vector.shape_cast %26 : vector<4x8xf32> to vector<4x8x1xf32>
    %28 = tpu.reciprocal %27 {approx = true} : vector<4x8x1xf32> -> vector<4x8x1xf32>
    %29 = vector.broadcast %28 : vector<4x8x1xf32> to vector<4x8x8xf32>
    %30 = arith.mulf %25, %29 : vector<4x8x8xf32>
    %31 = arith.truncf %30 : vector<4x8x8xf32> to vector<4x8x8xbf16>
    "tpu.trace_start"() <{level = 10 : i32, message = "hqk,hkd->hqd"}> : () -> ()
    %cst_9 = arith.constant dense<0.000000e+00> : vector<4x8x8xf32>
    %32 = tpu.matmul %31, %19, %cst_9 {dimension_numbers = #tpu.dot_dimension_numbers<[2], [1], [1], [2], [0, 0, 0, 1, 1, 2], [0], [0]>} : vector<4x8x8xbf16>, vector<4x8x8xbf16>, vector<4x8x8xf32> -> vector<4x8x8xf32>
    "tpu.trace_stop"() : () -> ()
    %33 = tpu.transpose %32, [1, 0, 2] : vector<4x8x8xf32> -> vector<8x4x8xf32>
    %34 = vector.shape_cast %33 : vector<8x4x8xf32> to vector<8x32xf32>
    %35 = arith.truncf %34 : vector<8x32xf32> to vector<8x32xbf16>
    %c0_10 = arith.constant 0 : index
    %c0_11 = arith.constant 0 : index
    %36 = vector.load %arg4[%c0_10, %c0_11] : memref<32x32xbf16, #tpu.memory_space<vmem>>, vector<32x32xbf16>
    %cst_12 = arith.constant dense<0.000000e+00> : vector<8x32xf32>
    %37 = tpu.matmul %35, %36, %cst_12 {dimension_numbers = #tpu.dot_dimension_numbers<[1], [0], [0], [1], [0, 0, 1, 1], [], []>} : vector<8x32xbf16>, vector<32x32xbf16>, vector<8x32xf32> -> vector<8x32xf32>
    %c0_13 = arith.constant 0 : index
    %c0_14 = arith.constant 0 : index
    %38 = vector.load %arg5[%c0_13, %c0_14] : memref<1x32xf32, #tpu.memory_space<vmem>>, vector<1x32xf32>
    %39 = vector.broadcast %38 : vector<1x32xf32> to vector<8x32xf32>
    %40 = arith.addf %37, %39 : vector<8x32xf32>
    %41 = arith.addf %1, %40 : vector<8x32xf32>
    %c0_15 = arith.constant 0 : index
    %c0_16 = arith.constant 0 : index
    %42 = vector.load %arg6[%c0_15, %c0_16] : memref<1x32xf32, #tpu.memory_space<vmem>>, vector<1x32xf32>
    %c0_17 = arith.constant 0 : index
    %c0_18 = arith.constant 0 : index
    %43 = vector.load %arg7[%c0_17, %c0_18] : memref<1x32xf32, #tpu.memory_space<vmem>>, vector<1x32xf32>
    %cst_19 = arith.constant dense<0.000000e+00> : vector<8xf32>
    %44 = vector.multi_reduction <add>, %41, %cst_19 [1] : vector<8x32xf32> to vector<8xf32>
    %45 = vector.shape_cast %44 : vector<8xf32> to vector<8x1xf32>
    %cst_20 = arith.constant 3.200000e+01 : f32
    %46 = vector.broadcast %cst_20 : f32 to vector<8x1xf32>
    %47 = arith.divf %45, %46 : vector<8x1xf32>
    %48 = vector.broadcast %47 : vector<8x1xf32> to vector<8x32xf32>
    %49 = arith.subf %41, %48 : vector<8x32xf32>
    %50 = arith.mulf %49, %49 : vector<8x32xf32>
    %cst_21 = arith.constant dense<0.000000e+00> : vector<8xf32>
    %51 = vector.multi_reduction <add>, %50, %cst_21 [1] : vector<8x32xf32> to vector<8xf32>
    %52 = vector.shape_cast %51 : vector<8xf32> to vector<8x1xf32>
    %cst_22 = arith.constant 3.200000e+01 : f32
    %53 = vector.broadcast %cst_22 : f32 to vector<8x1xf32>
    %54 = arith.divf %52, %53 : vector<8x1xf32>
    %55 = vector.broadcast %47 : vector<8x1xf32> to vector<8x32xf32>
    %56 = arith.subf %41, %55 : vector<8x32xf32>
    %cst_23 = arith.constant 9.99999974E-6 : f32
    %57 = vector.broadcast %cst_23 : f32 to vector<8x1xf32>
    %58 = arith.addf %54, %57 : vector<8x1xf32>
    %59 = math.rsqrt %58 : vector<8x1xf32>
    %60 = vector.broadcast %59 : vector<8x1xf32> to vector<8x32xf32>
    %61 = arith.mulf %56, %60 : vector<8x32xf32>
    %62 = vector.broadcast %42 : vector<1x32xf32> to vector<8x32xf32>
    %63 = arith.mulf %61, %62 : vector<8x32xf32>
    %64 = vector.broadcast %43 : vector<1x32xf32> to vector<8x32xf32>
    %65 = arith.addf %63, %64 : vector<8x32xf32>
    %66 = arith.truncf %65 : vector<8x32xf32> to vector<8x32xbf16>
    %c0_24 = arith.constant 0 : index
    %c0_25 = arith.constant 0 : index
    %67 = vector.load %arg8[%c0_24, %c0_25] : memref<32x64xbf16, #tpu.memory_space<vmem>>, vector<32x64xbf16>
    %cst_26 = arith.constant dense<0.000000e+00> : vector<8x64xf32>
    %68 = tpu.matmul %66, %67, %cst_26 {dimension_numbers = #tpu.dot_dimension_numbers<[1], [0], [0], [1], [0, 0, 1, 1], [], []>} : vector<8x32xbf16>, vector<32x64xbf16>, vector<8x64xf32> -> vector<8x64xf32>
    %c0_27 = arith.constant 0 : index
    %c0_28 = arith.constant 0 : index
    %69 = vector.load %arg9[%c0_27, %c0_28] : memref<1x64xf32, #tpu.memory_space<vmem>>, vector<1x64xf32>
    %70 = vector.broadcast %69 : vector<1x64xf32> to vector<8x64xf32>
    %71 = arith.addf %68, %70 : vector<8x64xf32>
    %cst_29 = arith.constant 0.000000e+00 : f32
    %72 = vector.broadcast %cst_29 : f32 to vector<8x64xf32>
    %73 = arith.maximumf %71, %72 : vector<8x64xf32>
    %74 = arith.truncf %73 : vector<8x64xf32> to vector<8x64xbf16>
    %c0_30 = arith.constant 0 : index
    %c0_31 = arith.constant 0 : index
    %75 = vector.load %arg10[%c0_30, %c0_31] : memref<64x32xbf16, #tpu.memory_space<vmem>>, vector<64x32xbf16>
    %cst_32 = arith.constant dense<0.000000e+00> : vector<8x32xf32>
    %76 = tpu.matmul %74, %75, %cst_32 {dimension_numbers = #tpu.dot_dimension_numbers<[1], [0], [0], [1], [0, 0, 1, 1], [], []>} : vector<8x64xbf16>, vector<64x32xbf16>, vector<8x32xf32> -> vector<8x32xf32>
    %c0_33 = arith.constant 0 : index
    %c0_34 = arith.constant 0 : index
    %77 = vector.load %arg11[%c0_33, %c0_34] : memref<1x32xf32, #tpu.memory_space<vmem>>, vector<1x32xf32>
    %78 = vector.broadcast %77 : vector<1x32xf32> to vector<8x32xf32>
    %79 = arith.addf %76, %78 : vector<8x32xf32>
    %80 = arith.addf %65, %79 : vector<8x32xf32>
    %c0_35 = arith.constant 0 : index
    %c0_36 = arith.constant 0 : index
    %81 = vector.load %arg12[%c0_35, %c0_36] : memref<1x32xf32, #tpu.memory_space<vmem>>, vector<1x32xf32>
    %c0_37 = arith.constant 0 : index
    %c0_38 = arith.constant 0 : index
    %82 = vector.load %arg13[%c0_37, %c0_38] : memref<1x32xf32, #tpu.memory_space<vmem>>, vector<1x32xf32>
    %cst_39 = arith.constant dense<0.000000e+00> : vector<8xf32>
    %83 = vector.multi_reduction <add>, %80, %cst_39 [1] : vector<8x32xf32> to vector<8xf32>
    %84 = vector.shape_cast %83 : vector<8xf32> to vector<8x1xf32>
    %cst_40 = arith.constant 3.200000e+01 : f32
    %85 = vector.broadcast %cst_40 : f32 to vector<8x1xf32>
    %86 = arith.divf %84, %85 : vector<8x1xf32>
    %87 = vector.broadcast %86 : vector<8x1xf32> to vector<8x32xf32>
    %88 = arith.subf %80, %87 : vector<8x32xf32>
    %89 = arith.mulf %88, %88 : vector<8x32xf32>
    %cst_41 = arith.constant dense<0.000000e+00> : vector<8xf32>
    %90 = vector.multi_reduction <add>, %89, %cst_41 [1] : vector<8x32xf32> to vector<8xf32>
    %91 = vector.shape_cast %90 : vector<8xf32> to vector<8x1xf32>
    %cst_42 = arith.constant 3.200000e+01 : f32
    %92 = vector.broadcast %cst_42 : f32 to vector<8x1xf32>
    %93 = arith.divf %91, %92 : vector<8x1xf32>
    %94 = vector.broadcast %86 : vector<8x1xf32> to vector<8x32xf32>
    %95 = arith.subf %80, %94 : vector<8x32xf32>
    %cst_43 = arith.constant 9.99999974E-6 : f32
    %96 = vector.broadcast %cst_43 : f32 to vector<8x1xf32>
    %97 = arith.addf %93, %96 : vector<8x1xf32>
    %98 = math.rsqrt %97 : vector<8x1xf32>
    %99 = vector.broadcast %98 : vector<8x1xf32> to vector<8x32xf32>
    %100 = arith.mulf %95, %99 : vector<8x32xf32>
    %101 = vector.broadcast %81 : vector<1x32xf32> to vector<8x32xf32>
    %102 = arith.mulf %100, %101 : vector<8x32xf32>
    %103 = vector.broadcast %82 : vector<1x32xf32> to vector<8x32xf32>
    %104 = arith.addf %102, %103 : vector<8x32xf32>
    %c0_44 = arith.constant 0 : index
    %c0_45 = arith.constant 0 : index
    %c0_46 = arith.constant 0 : index
    %105 = vector.load %arg14[%c0_44, %c0_45, %c0_46] : memref<1x8x32xf32, #tpu.memory_space<vmem>>, vector<1x8x32xf32>
    %106 = vector.shape_cast %105 : vector<1x8x32xf32> to vector<8x32xf32>
    %107 = vector.shape_cast %104 : vector<8x32xf32> to vector<1x8x32xf32>
    tpu.vector_store %arg14[%c0_44, %c0_45, %c0_46], %107 {strides = array<i32>} : memref<1x8x32xf32, #tpu.memory_space<vmem>>, vector<1x8x32xf32>,
    return
  }
  func.func @transform_0(%arg0: i32) -> (i32, i32, i32) {
    %c0_i32 = arith.constant 0 : i32
    %c0_i32_0 = arith.constant 0 : i32
    %c0_i32_1 = arith.constant 0 : i32
    return %arg0, %c0_i32, %c0_i32_0 : i32, i32, i32
  }
  func.func @transform_1(%arg0: i32) -> (i32, i32) {
    %c0_i32 = arith.constant 0 : i32
    %c0_i32_0 = arith.constant 0 : i32
    %c0_i32_1 = arith.constant 0 : i32
    return %c0_i32, %c0_i32_0 : i32, i32
  }
  func.func @transform_2(%arg0: i32) -> (i32, i32) {
    %c0_i32 = arith.constant 0 : i32
    %c0_i32_0 = arith.constant 0 : i32
    %c0_i32_1 = arith.constant 0 : i32
    return %c0_i32, %c0_i32_0 : i32, i32
  }
  func.func @transform_3(%arg0: i32) -> (i32, i32) {
    %c0_i32 = arith.constant 0 : i32
    %c0_i32_0 = arith.constant 0 : i32
    %c0_i32_1 = arith.constant 0 : i32
    return %c0_i32, %c0_i32_0 : i32, i32
  }
  func.func @transform_4(%arg0: i32) -> (i32, i32) {
    %c0_i32 = arith.constant 0 : i32
    %c0_i32_0 = arith.constant 0 : i32
    %c0_i32_1 = arith.constant 0 : i32
    return %c0_i32, %c0_i32_0 : i32, i32
  }
  func.func @transform_5(%arg0: i32) -> (i32, i32) {
    %c0_i32 = arith.constant 0 : i32
    %c0_i32_0 = arith.constant 0 : i32
    %c0_i32_1 = arith.constant 0 : i32
    return %c0_i32, %c0_i32_0 : i32, i32
  }
  func.func @transform_6(%arg0: i32) -> (i32, i32) {
    %c0_i32 = arith.constant 0 : i32
    %c0_i32_0 = arith.constant 0 : i32
    %c0_i32_1 = arith.constant 0 : i32
    return %c0_i32, %c0_i32_0 : i32, i32
  }
  func.func @transform_7(%arg0: i32) -> (i32, i32) {
    %c0_i32 = arith.constant 0 : i32
    %c0_i32_0 = arith.constant 0 : i32
    %c0_i32_1 = arith.constant 0 : i32
    return %c0_i32, %c0_i32_0 : i32, i32
  }
  func.func @transform_8(%arg0: i32) -> (i32, i32) {
    %c0_i32 = arith.constant 0 : i32
    %c0_i32_0 = arith.constant 0 : i32
    %c0_i32_1 = arith.constant 0 : i32
    return %c0_i32, %c0_i32_0 : i32, i32
  }
  func.func @transform_9(%arg0: i32) -> (i32, i32) {
    %c0_i32 = arith.constant 0 : i32
    %c0_i32_0 = arith.constant 0 : i32
    %c0_i32_1 = arith.constant 0 : i32
    return %c0_i32, %c0_i32_0 : i32, i32
  }
  func.func @transform_10(%arg0: i32) -> (i32, i32) {
    %c0_i32 = arith.constant 0 : i32
    %c0_i32_0 = arith.constant 0 : i32
    %c0_i32_1 = arith.constant 0 : i32
    return %c0_i32, %c0_i32_0 : i32, i32
  }
  func.func @transform_11(%arg0: i32) -> (i32, i32) {
    %c0_i32 = arith.constant 0 : i32
    %c0_i32_0 = arith.constant 0 : i32
    %c0_i32_1 = arith.constant 0 : i32
    return %c0_i32, %c0_i32_0 : i32, i32
  }
  func.func @transform_12(%arg0: i32) -> (i32, i32) {
    %c0_i32 = arith.constant 0 : i32
    %c0_i32_0 = arith.constant 0 : i32
    %c0_i32_1 = arith.constant 0 : i32
    return %c0_i32, %c0_i32_0 : i32, i32
  }
  func.func @transform_13(%arg0: i32) -> (i32, i32, i32) {
    %c0_i32 = arith.constant 0 : i32
    %c0_i32_0 = arith.constant 0 : i32
    %c0_i32_1 = arith.constant 0 : i32
    return %arg0, %c0_i32, %c0_i32_0 : i32, i32, i32
  }
}

</mosaic_0001>

<llo_original>
// kernel: tpu_custom_call.1
$region0: #{tpu_custom_call.1}
  #allocation0 [shape = 'u32[]', space=smem, size = 0x4, offset = 0x4, fixed_abs, tag = 'smem constant byte address 0x4 - core index']
  #allocation1 [shape = 'u32[72,128]{1,0:T(1,128)}', space=vmem, size = 0x9000, scoped, tag = 'internal scratch']
  %s0 = inlined_call_operand.vmem [shape: f32[2,8,32], index: 0, kind: input, shape index: {}]
  %s1 = inlined_call_operand.vmem [shape: bf16[32,96], index: 1, kind: input, shape index: {}]
  %s2 = inlined_call_operand.vmem [shape: f32[1,96], index: 2, kind: input, shape index: {}]
  %s3 = inlined_call_operand.vmem [shape: bf16[32,32], index: 3, kind: input, shape index: {}]
  %s4 = inlined_call_operand.vmem [shape: f32[1,32], index: 4, kind: input, shape index: {}]
  %s5 = inlined_call_operand.vmem [shape: f32[1,32], index: 5, kind: input, shape index: {}]
  %s6 = inlined_call_operand.vmem [shape: f32[1,32], index: 6, kind: input, shape index: {}]
  %s7 = inlined_call_operand.hbm [shape: bf16[32,64], index: 7, kind: input, shape index: {}]
  %s8 = inlined_call_operand.vmem [shape: f32[1,64], index: 8, kind: input, shape index: {}]
  %s9 = inlined_call_operand.vmem [shape: bf16[64,32], index: 9, kind: input, shape index: {}]
  %s10 = inlined_call_operand.vmem [shape: f32[1,32], index: 10, kind: input, shape index: {}]
  %s11 = inlined_call_operand.vmem [shape: f32[1,32], index: 11, kind: input, shape index: {}]
  %s12 = inlined_call_operand.vmem [shape: f32[1,32], index: 12, kind: input, shape index: {}]
  %s13 = inlined_call_operand.hbm [shape: f32[2,8,32], index: 13, kind: output, shape index: {}]
  %s14 = sld [smem:[#allocation0]]
  $region89: #{tpu_custom_call.1} parent=0
    _
  %s16 = ssub.s32 1, %s14
  %s17 = scalar_select 0, %s16, %s14
  $region1: #{tpu_custom_call.1} parent=0
    #allocation2 [shape = 'u8[8192]{0}', space=vmem, size = 0x2000, scoped, tag = 'input window, operand 7, single buffered']
    #allocation3 [shape = 's32[2]{0}', space=sflag, size = 0x8, scoped, tag = 'scoped memory for tpu_custom_call.1']
    #allocation4 [shape = 's32[2]{0}', space=sflag, size = 0x8, scoped, tag = 'scoped memory for tpu_custom_call.1']
    #allocation5 [shape = 'u8[8192]{0}', space=vmem, size = 0x2000, scoped, tag = 'output window, operand 0']
    %18 = vsyncpa [#allocation3], 0
    %19 = vsyncpa [#allocation4], 0
    %s20 = scalar_lea.sflag [#allocation4], 1
    %21 = vsyncpa %s20, 0
    loop: start=0, step=1, limit=4
    $region2: #{tpu_custom_call.1} parent=1 // loop_pre_header
      _
    $region3: #{tpu_custom_call.1} parent=1 // loop_header
      %s23 = sphi 0, %s27
      %p24 = scmp.ge.s32.totalorder %s23, 4
      %s33 = sphi 0, %s35
      %s36 = sphi 0, %s33
      %s37 = sphi 0, %s36
      %s53 = sphi 0, %s37
      %s57 = sphi 0, %s57
      %s59 = sphi 0, %s57
      %s60 = sphi 0, %s59
      %s74 = sphi 0, %s60
      %s78 = sphi 0, %s78
      %s80 = sphi 0, %s78
      %s81 = sphi 0, %s80
      %s95 = sphi 0, %s81
      %s99 = sphi 0, %s99
      %s101 = sphi 0, %s99
      %s102 = sphi 0, %s101
      %s116 = sphi 0, %s102
      %s120 = sphi 0, %s120
      %s122 = sphi 0, %s120
      %s123 = sphi 0, %s122
      %s137 = sphi 0, %s123
      %s141 = sphi 0, %s141
      %s143 = sphi 0, %s141
      %s144 = sphi 0, %s143
      %s158 = sphi 0, %s144
      %s162 = sphi 0, %s162
      %s164 = sphi 0, %s162
      %s165 = sphi 0, %s164
      %s179 = sphi 0, %s165
      %s183 = sphi 0, %s183
      %s185 = sphi 0, %s183
      %s186 = sphi 0, %s185
      %s200 = sphi 0, %s186
      %s204 = sphi 0, %s204
      %s206 = sphi 0, %s204
      %s207 = sphi 0, %s206
      %s221 = sphi 0, %s207
      %s225 = sphi 0, %s225
      %s227 = sphi 0, %s225
      %s228 = sphi 0, %s227
      %s242 = sphi 0, %s228
      %s246 = sphi 0, %s246
      %s248 = sphi 0, %s246
      %s249 = sphi 0, %s248
      %s263 = sphi 0, %s249
      %s267 = sphi 0, %s267
      %s269 = sphi 0, %s267
      %s270 = sphi 0, %s269
      %s284 = sphi 0, %s270
      %s288 = sphi 0, %s288
      %s290 = sphi 0, %s288
      %s291 = sphi 0, %s290
      %s305 = sphi 0, %s291
      %s311 = sphi 0, %s313
      %s314 = sphi 0, %s311
      %s315 = sphi 0, %s314
      %s331 = sphi 0, %s315
    $region4: #{tpu_custom_call.1} parent=1 // loop_header_branch
      %26 = sbr.rel (%p24) target = $region8
    $region5: #{tpu_custom_call.1} parent=1 // loop_body
      %s28 = ssub.s32 %s23, 1
      %s29 = ssub.s32 %s23, 2
      %s30 = sadd.s32 %s23, 1
      %s31 = ssub.s32 %s23, %s30
      %p32 = scmp.eq.s32.totalorder %s31, 0
      %s34 = sadd.s32 %s33, 1
      %s35 = scalar_select %p32, %s33, %s34
      %p38 = pneg %p32
      %p39 = scmp.eq.s32.totalorder %s23, 1
      %p40 = por %p38, %p39
      %p41 = scmp.ne.s32.totalorder %s33, %s36
      %p42 = scmp.eq.s32.totalorder %s23, 0
      %p43 = por %p41, %p42
      %p44 = scmp.ne.s32.totalorder %s33, %s36
      %p45 = scmp.eq.s32.totalorder %s28, 1
      %p46 = por %p44, %p45
      %p47 = scmp.ne.s32.totalorder %s36, %s37
      %p48 = scmp.eq.s32.totalorder %s28, 0
      %p49 = por %p47, %p48
      %p50 = scmp.ne.s32.totalorder %s36, %s37
      %p51 = scmp.eq.s32.totalorder %s29, 1
      %p52 = por %p50, %p51
      %p54 = scmp.ne.s32.totalorder %s37, %s53
      %p55 = scmp.eq.s32.totalorder %s29, 0
      %p56 = por %p54, %p55
      %s58 = sadd.s32 %s57, 1
      %p61 = scmp.eq.s32.totalorder %s23, 1
      %p62 = scmp.ne.s32.totalorder %s57, %s59
      %p63 = scmp.eq.s32.totalorder %s23, 0
      %p64 = por %p62, %p63
      %p65 = scmp.ne.s32.totalorder %s57, %s59
      %p66 = scmp.eq.s32.totalorder %s28, 1
      %p67 = por %p65, %p66
      %p68 = scmp.ne.s32.totalorder %s59, %s60
      %p69 = scmp.eq.s32.totalorder %s28, 0
      %p70 = por %p68, %p69
      %p71 = scmp.ne.s32.totalorder %s59, %s60
      %p72 = scmp.eq.s32.totalorder %s29, 1
      %p73 = por %p71, %p72
      %p75 = scmp.ne.s32.totalorder %s60, %s74
      %p76 = scmp.eq.s32.totalorder %s29, 0
      %p77 = por %p75, %p76
      %s79 = sadd.s32 %s78, 1
      %p82 = scmp.eq.s32.totalorder %s23, 1
      %p83 = scmp.ne.s32.totalorder %s78, %s80
      %p84 = scmp.eq.s32.totalorder %s23, 0
      %p85 = por %p83, %p84
      %p86 = scmp.ne.s32.totalorder %s78, %s80
      %p87 = scmp.eq.s32.totalorder %s28, 1
      %p88 = por %p86, %p87
      %p89 = scmp.ne.s32.totalorder %s80, %s81
      %p90 = scmp.eq.s32.totalorder %s28, 0
      %p91 = por %p89, %p90
      %p92 = scmp.ne.s32.totalorder %s80, %s81
      %p93 = scmp.eq.s32.totalorder %s29, 1
      %p94 = por %p92, %p93
      %p96 = scmp.ne.s32.totalorder %s81, %s95
      %p97 = scmp.eq.s32.totalorder %s29, 0
      %p98 = por %p96, %p97
      %s100 = sadd.s32 %s99, 1
      %p103 = scmp.eq.s32.totalorder %s23, 1
      %p104 = scmp.ne.s32.totalorder %s99, %s101
      %p105 = scmp.eq.s32.totalorder %s23, 0
      %p106 = por %p104, %p105
      %p107 = scmp.ne.s32.totalorder %s99, %s101
      %p108 = scmp.eq.s32.totalorder %s28, 1
      %p109 = por %p107, %p108
      %p110 = scmp.ne.s32.totalorder %s101, %s102
      %p111 = scmp.eq.s32.totalorder %s28, 0
      %p112 = por %p110, %p111
      %p113 = scmp.ne.s32.totalorder %s101, %s102
      %p114 = scmp.eq.s32.totalorder %s29, 1
      %p115 = por %p113, %p114
      %p117 = scmp.ne.s32.totalorder %s102, %s116
      %p118 = scmp.eq.s32.totalorder %s29, 0
      %p119 = por %p117, %p118
      %s121 = sadd.s32 %s120, 1
      %p124 = scmp.eq.s32.totalorder %s23, 1
      %p125 = scmp.ne.s32.totalorder %s120, %s122
      %p126 = scmp.eq.s32.totalorder %s23, 0
      %p127 = por %p125, %p126
      %p128 = scmp.ne.s32.totalorder %s120, %s122
      %p129 = scmp.eq.s32.totalorder %s28, 1
      %p130 = por %p128, %p129
      %p131 = scmp.ne.s32.totalorder %s122, %s123
      %p132 = scmp.eq.s32.totalorder %s28, 0
      %p133 = por %p131, %p132
      %p134 = scmp.ne.s32.totalorder %s122, %s123
      %p135 = scmp.eq.s32.totalorder %s29, 1
      %p136 = por %p134, %p135
      %p138 = scmp.ne.s32.totalorder %s123, %s137
      %p139 = scmp.eq.s32.totalorder %s29, 0
      %p140 = por %p138, %p139
      %s142 = sadd.s32 %s141, 1
      %p145 = scmp.eq.s32.totalorder %s23, 1
      %p146 = scmp.ne.s32.totalorder %s141, %s143
      %p147 = scmp.eq.s32.totalorder %s23, 0
      %p148 = por %p146, %p147
      %p149 = scmp.ne.s32.totalorder %s141, %s143
      %p150 = scmp.eq.s32.totalorder %s28, 1
      %p151 = por %p149, %p150
      %p152 = scmp.ne.s32.totalorder %s143, %s144
      %p153 = scmp.eq.s32.totalorder %s28, 0
      %p154 = por %p152, %p153
      %p155 = scmp.ne.s32.totalorder %s143, %s144
      %p156 = scmp.eq.s32.totalorder %s29, 1
      %p157 = por %p155, %p156
      %p159 = scmp.ne.s32.totalorder %s144, %s158
      %p160 = scmp.eq.s32.totalorder %s29, 0
      %p161 = por %p159, %p160
      %s163 = sadd.s32 %s162, 1
      %p166 = scmp.eq.s32.totalorder %s23, 1
      %p167 = scmp.ne.s32.totalorder %s162, %s164
      %p168 = scmp.eq.s32.totalorder %s23, 0
      %p169 = por %p167, %p168
      %p170 = scmp.ne.s32.totalorder %s162, %s164
      %p171 = scmp.eq.s32.totalorder %s28, 1
      %p172 = por %p170, %p171
      %p173 = scmp.ne.s32.totalorder %s164, %s165
      %p174 = scmp.eq.s32.totalorder %s28, 0
      %p175 = por %p173, %p174
      %p176 = scmp.ne.s32.totalorder %s164, %s165
      %p177 = scmp.eq.s32.totalorder %s29, 1
      %p178 = por %p176, %p177
      %p180 = scmp.ne.s32.totalorder %s165, %s179
      %p181 = scmp.eq.s32.totalorder %s29, 0
      %p182 = por %p180, %p181
      %s184 = sadd.s32 %s183, 1
      %p187 = scmp.eq.s32.totalorder %s23, 1
      %p188 = scmp.ne.s32.totalorder %s183, %s185
      %p189 = scmp.eq.s32.totalorder %s23, 0
      %p190 = por %p188, %p189
      %p191 = scmp.ne.s32.totalorder %s183, %s185
      %p192 = scmp.eq.s32.totalorder %s28, 1
      %p193 = por %p191, %p192
      %p194 = scmp.ne.s32.totalorder %s185, %s186
      %p195 = scmp.eq.s32.totalorder %s28, 0
      %p196 = por %p194, %p195
      %p197 = scmp.ne.s32.totalorder %s185, %s186
      %p198 = scmp.eq.s32.totalorder %s29, 1
      %p199 = por %p197, %p198
      %p201 = scmp.ne.s32.totalorder %s186, %s200
      %p202 = scmp.eq.s32.totalorder %s29, 0
      %p203 = por %p201, %p202
      %s205 = sadd.s32 %s204, 1
      %p208 = scmp.eq.s32.totalorder %s23, 1
      %p209 = scmp.ne.s32.totalorder %s204, %s206
      %p210 = scmp.eq.s32.totalorder %s23, 0
      %p211 = por %p209, %p210
      %p212 = scmp.ne.s32.totalorder %s204, %s206
      %p213 = scmp.eq.s32.totalorder %s28, 1
      %p214 = por %p212, %p213
      %p215 = scmp.ne.s32.totalorder %s206, %s207
      %p216 = scmp.eq.s32.totalorder %s28, 0
      %p217 = por %p215, %p216
      %p218 = scmp.ne.s32.totalorder %s206, %s207
      %p219 = scmp.eq.s32.totalorder %s29, 1
      %p220 = por %p218, %p219
      %p222 = scmp.ne.s32.totalorder %s207, %s221
      %p223 = scmp.eq.s32.totalorder %s29, 0
      %p224 = por %p222, %p223
      %s226 = sadd.s32 %s225, 1
      %p229 = scmp.eq.s32.totalorder %s23, 1
      %p230 = scmp.ne.s32.totalorder %s225, %s227
      %p231 = scmp.eq.s32.totalorder %s23, 0
      %p232 = por %p230, %p231
      %p233 = scmp.ne.s32.totalorder %s225, %s227
      %p234 = scmp.eq.s32.totalorder %s28, 1
      %p235 = por %p233, %p234
      %p236 = scmp.ne.s32.totalorder %s227, %s228
      %p237 = scmp.eq.s32.totalorder %s28, 0
      %p238 = por %p236, %p237
      %p239 = scmp.ne.s32.totalorder %s227, %s228
      %p240 = scmp.eq.s32.totalorder %s29, 1
      %p241 = por %p239, %p240
      %p243 = scmp.ne.s32.totalorder %s228, %s242
      %p244 = scmp.eq.s32.totalorder %s29, 0
      %p245 = por %p243, %p244
      %s247 = sadd.s32 %s246, 1
      %p250 = scmp.eq.s32.totalorder %s23, 1
      %p251 = scmp.ne.s32.totalorder %s246, %s248
      %p252 = scmp.eq.s32.totalorder %s23, 0
      %p253 = por %p251, %p252
      %p254 = scmp.ne.s32.totalorder %s246, %s248
      %p255 = scmp.eq.s32.totalorder %s28, 1
      %p256 = por %p254, %p255
      %p257 = scmp.ne.s32.totalorder %s248, %s249
      %p258 = scmp.eq.s32.totalorder %s28, 0
      %p259 = por %p257, %p258
      %p260 = scmp.ne.s32.totalorder %s248, %s249
      %p261 = scmp.eq.s32.totalorder %s29, 1
      %p262 = por %p260, %p261
      %p264 = scmp.ne.s32.totalorder %s249, %s263
      %p265 = scmp.eq.s32.totalorder %s29, 0
      %p266 = por %p264, %p265
      %s268 = sadd.s32 %s267, 1
      %p271 = scmp.eq.s32.totalorder %s23, 1
      %p272 = scmp.ne.s32.totalorder %s267, %s269
      %p273 = scmp.eq.s32.totalorder %s23, 0
      %p274 = por %p272, %p273
      %p275 = scmp.ne.s32.totalorder %s267, %s269
      %p276 = scmp.eq.s32.totalorder %s28, 1
      %p277 = por %p275, %p276
      %p278 = scmp.ne.s32.totalorder %s269, %s270
      %p279 = scmp.eq.s32.totalorder %s28, 0
      %p280 = por %p278, %p279
      %p281 = scmp.ne.s32.totalorder %s269, %s270
      %p282 = scmp.eq.s32.totalorder %s29, 1
      %p283 = por %p281, %p282
      %p285 = scmp.ne.s32.totalorder %s270, %s284
      %p286 = scmp.eq.s32.totalorder %s29, 0
      %p287 = por %p285, %p286
      %s289 = sadd.s32 %s288, 1
      %p292 = scmp.eq.s32.totalorder %s23, 1
      %p293 = scmp.ne.s32.totalorder %s288, %s290
      %p294 = scmp.eq.s32.totalorder %s23, 0
      %p295 = por %p293, %p294
      %p296 = scmp.ne.s32.totalorder %s288, %s290
      %p297 = scmp.eq.s32.totalorder %s28, 1
      %p298 = por %p296, %p297
      %p299 = scmp.ne.s32.totalorder %s290, %s291
      %p300 = scmp.eq.s32.totalorder %s28, 0
      %p301 = por %p299, %p300
      %p302 = scmp.ne.s32.totalorder %s290, %s291
      %p303 = scmp.eq.s32.totalorder %s29, 1
      %p304 = por %p302, %p303
      %p306 = scmp.ne.s32.totalorder %s291, %s305
      %p307 = scmp.eq.s32.totalorder %s29, 0
      %p308 = por %p306, %p307
      %s309 = ssub.s32 %s23, %s30
      %p310 = scmp.eq.s32.totalorder %s309, 0
      %s312 = sadd.s32 %s311, 1
      %s313 = scalar_select %p310, %s311, %s312
      %p316 = pneg %p310
      %p317 = scmp.eq.s32.totalorder %s23, 1
      %p318 = por %p316, %p317
      %p319 = scmp.ne.s32.totalorder %s311, %s314
      %p320 = scmp.eq.s32.totalorder %s23, 0
      %p321 = por %p319, %p320
      %p322 = scmp.ne.s32.totalorder %s311, %s314
      %p323 = scmp.eq.s32.totalorder %s28, 1
      %p324 = por %p322, %p323
      %p325 = scmp.ne.s32.totalorder %s314, %s315
      %p326 = scmp.eq.s32.totalorder %s28, 0
      %p327 = por %p325, %p326
      %p328 = scmp.ne.s32.totalorder %s314, %s315
      %p329 = scmp.eq.s32.totalorder %s29, 1
      %p330 = por %p328, %p329
      %p332 = scmp.ne.s32.totalorder %s315, %s331
      %p333 = scmp.eq.s32.totalorder %s29, 0
      %p334 = por %p332, %p333
      %p335 = scmp.le.s32.totalorder 1, %s23
      %p336 = scmp.lt.s32.totalorder %s23, 3
      %p337 = pnand %p335, %p336
      %p338 = pneg %p337
      // Predicated region
      $region9: #{tpu_custom_call.1} parent=5 // pred_check
        _
      $region10: #{tpu_custom_call.1} parent=5 // pred_check_branch
        %340 = sbr.rel (%p337) target = $region12
      $region11: #{tpu_custom_call.1} parent=5 // pred_region
        %s341 = ssub.s32 %s23, 1
        // Predicated region
        $region13: #{tpu_custom_call.1} parent=11 // pred_check
          %p342 = pneg %p70
        $region14: #{tpu_custom_call.1} parent=11 // pred_check_branch
          %344 = sbr.rel (%p342) target = $region16
        $region15: #{tpu_custom_call.1} parent=11 // pred_region
          _
        $region16: #{tpu_custom_call.1} parent=11 // pred_fallthru
          _
        // Predicated region
        $region17: #{tpu_custom_call.1} parent=11 // pred_check
          %p345 = pneg %p91
        $region18: #{tpu_custom_call.1} parent=11 // pred_check_branch
          %347 = sbr.rel (%p345) target = $region20
        $region19: #{tpu_custom_call.1} parent=11 // pred_region
          _
        $region20: #{tpu_custom_call.1} parent=11 // pred_fallthru
          _
        // Predicated region
        $region21: #{tpu_custom_call.1} parent=11 // pred_check
          %p348 = pneg %p112
        $region22: #{tpu_custom_call.1} parent=11 // pred_check_branch
          %350 = sbr.rel (%p348) target = $region24
        $region23: #{tpu_custom_call.1} parent=11 // pred_region
          _
        $region24: #{tpu_custom_call.1} parent=11 // pred_fallthru
          _
        // Predicated region
        $region25: #{tpu_custom_call.1} parent=11 // pred_check
          %p351 = pneg %p133
        $region26: #{tpu_custom_call.1} parent=11 // pred_check_branch
          %353 = sbr.rel (%p351) target = $region28
        $region27: #{tpu_custom_call.1} parent=11 // pred_region
          _
        $region28: #{tpu_custom_call.1} parent=11 // pred_fallthru
          _
        // Predicated region
        $region29: #{tpu_custom_call.1} parent=11 // pred_check
          %p354 = pneg %p154
        $region30: #{tpu_custom_call.1} parent=11 // pred_check_branch
          %356 = sbr.rel (%p354) target = $region32
        $region31: #{tpu_custom_call.1} parent=11 // pred_region
          _
        $region32: #{tpu_custom_call.1} parent=11 // pred_fallthru
          _
        // Predicated region
        $region33: #{tpu_custom_call.1} parent=11 // pred_check
          %p357 = pneg %p175
        $region34: #{tpu_custom_call.1} parent=11 // pred_check_branch
          %359 = sbr.rel (%p357) target = $region36
        $region35: #{tpu_custom_call.1} parent=11 // pred_region
          _
        $region36: #{tpu_custom_call.1} parent=11 // pred_fallthru
          _
        // Predicated region
        $region37: #{tpu_custom_call.1} parent=11 // pred_check
          %p360 = pneg %p196
        $region38: #{tpu_custom_call.1} parent=11 // pred_check_branch
          %362 = sbr.rel (%p360) target = $region40
        $region39: #{tpu_custom_call.1} parent=11 // pred_region
          %364 = vsyncadd [#allocation3], 0
          %s365 = sshll.u32 %s7, 4
          %s366 = int_to_ptr.hbm [resolvable:$true] %s365
          %s367 = sshll.u32 [#allocation2], 4
          %s368 = int_to_ptr.vmem [resolvable:$true] %s367
          %373 = dma.hbm_to_vmem [thread:$0]  %s366, 256, %s368, [#allocation3], 64, 64, 4
        $region40: #{tpu_custom_call.1} parent=11 // pred_fallthru
          _
        // Predicated region
        $region41: #{tpu_custom_call.1} parent=11 // pred_check
          %p374 = pneg %p217
        $region42: #{tpu_custom_call.1} parent=11 // pred_check_branch
          %376 = sbr.rel (%p374) target = $region44
        $region43: #{tpu_custom_call.1} parent=11 // pred_region
          _
        $region44: #{tpu_custom_call.1} parent=11 // pred_fallthru
          _
        // Predicated region
        $region45: #{tpu_custom_call.1} parent=11 // pred_check
          %p377 = pneg %p238
        $region46: #{tpu_custom_call.1} parent=11 // pred_check_branch
          %379 = sbr.rel (%p377) target = $region48
        $region47: #{tpu_custom_call.1} parent=11 // pred_region
          _
        $region48: #{tpu_custom_call.1} parent=11 // pred_fallthru
          _
        // Predicated region
        $region49: #{tpu_custom_call.1} parent=11 // pred_check
          %p380 = pneg %p259
        $region50: #{tpu_custom_call.1} parent=11 // pred_check_branch
          %382 = sbr.rel (%p380) target = $region52
        $region51: #{tpu_custom_call.1} parent=11 // pred_region
          _
        $region52: #{tpu_custom_call.1} parent=11 // pred_fallthru
          _
        // Predicated region
        $region53: #{tpu_custom_call.1} parent=11 // pred_check
          %p383 = pneg %p280
        $region54: #{tpu_custom_call.1} parent=11 // pred_check_branch
          %385 = sbr.rel (%p383) target = $region56
        $region55: #{tpu_custom_call.1} parent=11 // pred_region
          _
        $region56: #{tpu_custom_call.1} parent=11 // pred_fallthru
          _
        // Predicated region
        $region57: #{tpu_custom_call.1} parent=11 // pred_check
          %p386 = pneg %p301
        $region58: #{tpu_custom_call.1} parent=11 // pred_check_branch
          %388 = sbr.rel (%p386) target = $region60
        $region59: #{tpu_custom_call.1} parent=11 // pred_region
          _
        $region60: #{tpu_custom_call.1} parent=11 // pred_fallthru
          _
      $region12: #{tpu_custom_call.1} parent=5 // pred_fallthru
        _
      %p389 = scmp.lt.s32.totalorder %s23, 2
      // Predicated region
      $region61: #{tpu_custom_call.1} parent=5 // pred_check
        %p390 = pneg %p389
      $region62: #{tpu_custom_call.1} parent=5 // pred_check_branch
        %392 = sbr.rel (%p390) target = $region64
      $region63: #{tpu_custom_call.1} parent=5 // pred_region
        // Predicated region
        $region65: #{tpu_custom_call.1} parent=63 // pred_check
          %p393 = pneg %p43
        $region66: #{tpu_custom_call.1} parent=63 // pred_check_branch
          %395 = sbr.rel (%p393) target = $region68
        $region67: #{tpu_custom_call.1} parent=63 // pred_region
          %p396 = scmp.lt.s32.totalorder %s23, 1
          %s397 = scalar_select %p396, %s23, 1
          %s398 = smul.addr %s397, 8
          %s399 = scalar_lea.vmem %s0, %s398
        $region68: #{tpu_custom_call.1} parent=63 // pred_fallthru
          _
      $region64: #{tpu_custom_call.1} parent=5 // pred_fallthru
        _
      %p400 = scmp.le.s32.totalorder 1, %s23
      %p401 = scmp.lt.s32.totalorder %s23, 3
      %p402 = pnand %p400, %p401
      %p403 = pneg %p402
      // Predicated region
      $region69: #{tpu_custom_call.1} parent=5 // pred_check
        _
      $region70: #{tpu_custom_call.1} parent=5 // pred_check_branch
        %405 = sbr.rel (%p402) target = $region72
      $region71: #{tpu_custom_call.1} parent=5 // pred_region
        %s406 = ssub.s32 %s23, 1
        // Predicated region
        $region73: #{tpu_custom_call.1} parent=71 // pred_check
          %p407 = pneg %p196
        $region74: #{tpu_custom_call.1} parent=71 // pred_check_branch
          %409 = sbr.rel (%p407) target = $region76
        $region75: #{tpu_custom_call.1} parent=71 // pred_region
          %411 = dma.done [#allocation3], 256
        $region76: #{tpu_custom_call.1} parent=71 // pred_fallthru
          _
        %p412 = scmp.lt.s32.totalorder %s28, 1
        %s413 = scalar_select %p412, %s28, 1
        %s414 = smul.addr %s413, 8
        %s415 = scalar_lea.vmem %s0, %s414
        %p416 = pneg %p49
        %p417 = pneg %p46
        %p418 = pneg %p70
        %p419 = pneg %p67
        %p420 = pneg %p91
        %p421 = pneg %p88
        %p422 = pneg %p112
        %p423 = pneg %p109
        %p424 = pneg %p133
        %p425 = pneg %p130
        %p426 = pneg %p154
        %p427 = pneg %p151
        %p428 = pneg %p175
        %p429 = pneg %p172
        %p430 = pneg %p196
        %p431 = pneg %p193
        %p432 = pneg %p217
        %p433 = pneg %p214
        %p434 = pneg %p238
        %p435 = pneg %p235
        %p436 = pneg %p259
        %p437 = pneg %p256
        %p438 = pneg %p280
        %p439 = pneg %p277
        %p440 = pneg %p301
        %p441 = pneg %p298
        %p442 = pneg %p327
        %p443 = pneg %p324
        %s444 = sand.u32 %s314, 1
        %s445 = scalar_lea.sflag [#allocation4], %s444
        %s446 = sand.u32 %s314, 1
        %s447 = smul.addr %s446, 8
        %s448 = scalar_lea.vmem [#allocation5], %s447
        %p449 = scmp.lt.s32.totalorder %s28, 1
        %s450 = scalar_select %p449, %s28, 1
        %s451 = smul.addr %s450, 8
        %s452 = scalar_lea.vmem %s0, %s451
        %v454 = vld [vmem:[%s452] sm:$0xff]
        %v455 = vpack.c.bf16 %v454, %v454
        %v456 = vld [vmem:[%s1] sm:$0xf]
        %v457 = vld [vmem:[%s1 + $0x4] sm:$0xf]
        %v458 = vld [vmem:[%s1 + $0x8] sm:$0xf]
        %v459 = vld [vmem:[%s1 + $0xc] sm:$0xf]
        %v460 = vld [vmem:[%s2] sm:$0x1]
        %v462 = vperm.slane %v460, 0
        %v468 = vunpack.c.l.b16 %v456
        %v469 = vunpack.c.l.b16 %v457
        %v470 = vunpack.c.l.b16 %v458
        %v471 = vunpack.c.l.b16 %v459
        %v472 = vpack.c.b16 %v469, %v468
        %v473 = vpack.c.b16 %v471, %v470
        %vm476 = vcmask 261120
        %v478 = vsel %vm476, %v455, 0
        %480 = vmatpush.bf16.msra.mxu0 0
        %481 = vmatpush.bf16.msra.mxu0 0
        %482 = vmatpush.bf16.msra.mxu0 0
        %483 = vmatpush.bf16.msra.mxu0 0
        %484 = vmatpush.bf16.msra.mxu0 0
        %485 = vmatpush.bf16.msra.mxu0 0
        %486 = vmatpush.bf16.msra.mxu0 %v473
        %487 = vmatpush.bf16.msra.mxu0 %v472
        %488 = vmatmul.bf16.gmra.mxu0 %v478
        %v489 = vpop.f32.mrf.mxu0
        %v490 = vadd.f32 %v462, %v489
        %v491 = vpop.f32.mrf.mxu0
        %492 = vdwg.mxu0
        %494 = vrot.lane.b32.xlu0 %v490, 120
        %v495 = vpop.permute.xlu0 %494
        %497 = vrot.lane.b32.xlu0 %v490, 112
        %v498 = vpop.permute.xlu0 %497
        %500 = vrot.lane.b32.xlu0 %v490, 104
        %v501 = vpop.permute.xlu0 %500
        %v503 = vrot.slane %v498, 4
        %vm504 = vcmask 1047556
        %v505 = vsel %vm504, %v503, %v490
        %v506 = vrot.slane %v490, 4
        %v507 = vsel %vm504, %v498, %v506
        %v509 = vunpack.c.l.s4 1983009808
        %v510 = vunpack.c.0.s8 %v509
        %v511 = vperm.slane %v505, %v510
        %v513 = vunpack.c.l.s4 1983009808
        %v514 = vunpack.c.0.s8 %v513
        %v515 = vperm.slane %v507, %v514
        %v516 = vrot.slane %v501, 4
        %v517 = vsel %vm504, %v516, %v495
        %v518 = vrot.slane %v495, 4
        %v519 = vsel %vm504, %v501, %v518
        %v521 = vunpack.c.l.s4 1983009808
        %v522 = vunpack.c.0.s8 %v521
        %v523 = vperm.slane %v517, %v522
        %v525 = vunpack.c.l.s4 1983009808
        %v526 = vunpack.c.0.s8 %v525
        %v527 = vperm.slane %v519, %v526
        %v528 = vrot.slane %v523, 4
        %v529 = vsel %vm504, %v528, %v511
        %v530 = vrot.slane %v511, 4
        %v531 = vsel %vm504, %v523, %v530
        %v533 = vunpack.c.l.s4 1934713408
        %v534 = vunpack.c.0.s8 %v533
        %v535 = vperm.slane %v529, %v534
        %v537 = vunpack.c.l.s4 1934713408
        %v538 = vunpack.c.0.s8 %v537
        %v539 = vperm.slane %v531, %v538
        %v540 = vrot.slane %v527, 4
        %v541 = vsel %vm504, %v540, %v515
        %v542 = vrot.slane %v515, 4
        %v543 = vsel %vm504, %v527, %v542
        %v545 = vunpack.c.l.s4 1934713408
        %v546 = vunpack.c.0.s8 %v545
        %v547 = vperm.slane %v541, %v546
        %v549 = vunpack.c.l.s4 1934713408
        %v550 = vunpack.c.0.s8 %v549
        %v551 = vperm.slane %v543, %v550
        %v552 = vrot.slane %v535, 4
        %v553 = vsel %vm504, 0.0, %v552
        %v554 = vrot.slane %v539, 4
        %v555 = vsel %vm504, 0.0, %v554
        %v556 = vrot.slane %v547, 4
        %v557 = vsel %vm504, 0.0, %v556
        %v558 = vrot.slane %v551, 4
        %v559 = vsel %vm504, 0.0, %v558
        %v560 = vsel %vm504, %v554, %v535
        %v562 = vunpack.c.l.s4 1983009808
        %v563 = vunpack.c.0.s8 %v562
        %v564 = vperm.slane %v560, %v563
        %v565 = vrot.slane %v555, 4
        %v566 = vsel %vm504, %v565, %v553
        %v568 = vunpack.c.l.s4 1983009808
        %v569 = vunpack.c.0.s8 %v568
        %v570 = vperm.slane %v566, %v569
        %v571 = vsel %vm504, %v558, %v547
        %v573 = vunpack.c.l.s4 1983009808
        %v574 = vunpack.c.0.s8 %v573
        %v575 = vperm.slane %v571, %v574
        %v576 = vrot.slane %v559, 4
        %v577 = vsel %vm504, %v576, %v557
        %v579 = vunpack.c.l.s4 1983009808
        %v580 = vunpack.c.0.s8 %v579
        %v581 = vperm.slane %v577, %v580
        %v582 = vrot.slane %v570, 4
        %v583 = vsel %vm504, %v582, %v564
        %v584 = vrot.slane %v564, 4
        %v585 = vsel %vm504, %v570, %v584
        %v587 = vunpack.c.l.s4 1934713408
        %v588 = vunpack.c.0.s8 %v587
        %v589 = vperm.slane %v583, %v588
        %v591 = vunpack.c.l.s4 1934713408
        %v592 = vunpack.c.0.s8 %v591
        %v593 = vperm.slane %v585, %v592
        %v594 = vrot.slane %v581, 4
        %v595 = vsel %vm504, %v594, %v575
        %v596 = vrot.slane %v575, 4
        %v597 = vsel %vm504, %v581, %v596
        %v599 = vunpack.c.l.s4 1934713408
        %v600 = vunpack.c.0.s8 %v599
        %v601 = vperm.slane %v595, %v600
        %v603 = vunpack.c.l.s4 1934713408
        %v604 = vunpack.c.0.s8 %v603
        %v605 = vperm.slane %v597, %v604
        %v606 = vrot.slane %v601, 4
        %v607 = vsel %vm504, %v606, %v589
        %v608 = vrot.slane %v589, 4
        %v609 = vsel %vm504, %v601, %v608
        %v610 = vrot.slane %v605, 4
        %v611 = vsel %vm504, %v610, %v593
        %v612 = vrot.slane %v593, 4
        %v613 = vsel %vm504, %v605, %v612
        %v614 = vpack.c.bf16 %v607, %v607
        %v615 = vpack.c.bf16 %v609, %v609
        %v616 = vpack.c.bf16 %v611, %v611
        %v617 = vpack.c.bf16 %v613, %v613
        %618 = vrot.lane.b32.xlu0 %v490, 96
        %v619 = vpop.permute.xlu0 %618
        %620 = vrot.lane.b32.xlu0 %v495, 96
        %v621 = vpop.permute.xlu0 %620
        %622 = vrot.lane.b32.xlu0 %v498, 96
        %v623 = vpop.permute.xlu0 %622
        %624 = vrot.lane.b32.xlu0 %v501, 96
        %v625 = vpop.permute.xlu0 %624
        %v630 = vrot.slane %v623, 4
        %v631 = vsel %vm504, %v630, %v619
        %v632 = vrot.slane %v619, 4
        %v633 = vsel %vm504, %v623, %v632
        %v635 = vunpack.c.l.s4 1983009808
        %v636 = vunpack.c.0.s8 %v635
        %v637 = vperm.slane %v631, %v636
        %v639 = vunpack.c.l.s4 1983009808
        %v640 = vunpack.c.0.s8 %v639
        %v641 = vperm.slane %v633, %v640
        %v642 = vrot.slane %v625, 4
        %v643 = vsel %vm504, %v642, %v621
        %v644 = vrot.slane %v621, 4
        %v645 = vsel %vm504, %v625, %v644
        %v647 = vunpack.c.l.s4 1983009808
        %v648 = vunpack.c.0.s8 %v647
        %v649 = vperm.slane %v643, %v648
        %v651 = vunpack.c.l.s4 1983009808
        %v652 = vunpack.c.0.s8 %v651
        %v653 = vperm.slane %v645, %v652
        %v654 = vrot.slane %v649, 4
        %v655 = vsel %vm504, %v654, %v637
        %v656 = vrot.slane %v637, 4
        %v657 = vsel %vm504, %v649, %v656
        %v659 = vunpack.c.l.s4 1934713408
        %v660 = vunpack.c.0.s8 %v659
        %v661 = vperm.slane %v655, %v660
        %v663 = vunpack.c.l.s4 1934713408
        %v664 = vunpack.c.0.s8 %v663
        %v665 = vperm.slane %v657, %v664
        %v666 = vrot.slane %v653, 4
        %v667 = vsel %vm504, %v666, %v641
        %v668 = vrot.slane %v641, 4
        %v669 = vsel %vm504, %v653, %v668
        %v671 = vunpack.c.l.s4 1934713408
        %v672 = vunpack.c.0.s8 %v671
        %v673 = vperm.slane %v667, %v672
        %v675 = vunpack.c.l.s4 1934713408
        %v676 = vunpack.c.0.s8 %v675
        %v677 = vperm.slane %v669, %v676
        %v678 = vrot.slane %v661, 4
        %v679 = vsel %vm504, 0.0, %v678
        %v680 = vrot.slane %v665, 4
        %v681 = vsel %vm504, 0.0, %v680
        %v682 = vrot.slane %v673, 4
        %v683 = vsel %vm504, 0.0, %v682
        %v684 = vrot.slane %v677, 4
        %v685 = vsel %vm504, 0.0, %v684
        %v686 = vsel %vm504, %v680, %v661
        %v688 = vunpack.c.l.s4 1983009808
        %v689 = vunpack.c.0.s8 %v688
        %v690 = vperm.slane %v686, %v689
        %v691 = vrot.slane %v681, 4
        %v692 = vsel %vm504, %v691, %v679
        %v694 = vunpack.c.l.s4 1983009808
        %v695 = vunpack.c.0.s8 %v694
        %v696 = vperm.slane %v692, %v695
        %v697 = vsel %vm504, %v684, %v673
        %v699 = vunpack.c.l.s4 1983009808
        %v700 = vunpack.c.0.s8 %v699
        %v701 = vperm.slane %v697, %v700
        %v702 = vrot.slane %v685, 4
        %v703 = vsel %vm504, %v702, %v683
        %v705 = vunpack.c.l.s4 1983009808
        %v706 = vunpack.c.0.s8 %v705
        %v707 = vperm.slane %v703, %v706
        %v708 = vrot.slane %v696, 4
        %v709 = vsel %vm504, %v708, %v690
        %v710 = vrot.slane %v690, 4
        %v711 = vsel %vm504, %v696, %v710
        %v713 = vunpack.c.l.s4 1934713408
        %v714 = vunpack.c.0.s8 %v713
        %v715 = vperm.slane %v709, %v714
        %v717 = vunpack.c.l.s4 1934713408
        %v718 = vunpack.c.0.s8 %v717
        %v719 = vperm.slane %v711, %v718
        %v720 = vrot.slane %v707, 4
        %v721 = vsel %vm504, %v720, %v701
        %v722 = vrot.slane %v701, 4
        %v723 = vsel %vm504, %v707, %v722
        %v725 = vunpack.c.l.s4 1934713408
        %v726 = vunpack.c.0.s8 %v725
        %v727 = vperm.slane %v721, %v726
        %v729 = vunpack.c.l.s4 1934713408
        %v730 = vunpack.c.0.s8 %v729
        %v731 = vperm.slane %v723, %v730
        %v732 = vrot.slane %v727, 4
        %v733 = vsel %vm504, %v732, %v715
        %v734 = vrot.slane %v715, 4
        %v735 = vsel %vm504, %v727, %v734
        %v736 = vrot.slane %v731, 4
        %v737 = vsel %vm504, %v736, %v719
        %v738 = vrot.slane %v719, 4
        %v739 = vsel %vm504, %v731, %v738
        %v740 = vpack.c.bf16 %v733, %v733
        %v741 = vpack.c.bf16 %v735, %v735
        %v742 = vpack.c.bf16 %v737, %v737
        %v743 = vpack.c.bf16 %v739, %v739
        %744 = vrot.lane.b32.xlu0 %v490, 64
        %v745 = vpop.permute.xlu0 %744
        %746 = vrot.lane.b32.xlu0 %v495, 64
        %v747 = vpop.permute.xlu0 %746
        %748 = vrot.lane.b32.xlu0 %v498, 64
        %v749 = vpop.permute.xlu0 %748
        %750 = vrot.lane.b32.xlu0 %v501, 64
        %v751 = vpop.permute.xlu0 %750
        %v756 = vrot.slane %v749, 4
        %v757 = vsel %vm504, %v756, %v745
        %v758 = vrot.slane %v745, 4
        %v759 = vsel %vm504, %v749, %v758
        %v761 = vunpack.c.l.s4 1983009808
        %v762 = vunpack.c.0.s8 %v761
        %v763 = vperm.slane %v757, %v762
        %v765 = vunpack.c.l.s4 1983009808
        %v766 = vunpack.c.0.s8 %v765
        %v767 = vperm.slane %v759, %v766
        %v768 = vrot.slane %v751, 4
        %v769 = vsel %vm504, %v768, %v747
        %v770 = vrot.slane %v747, 4
        %v771 = vsel %vm504, %v751, %v770
        %v773 = vunpack.c.l.s4 1983009808
        %v774 = vunpack.c.0.s8 %v773
        %v775 = vperm.slane %v769, %v774
        %v777 = vunpack.c.l.s4 1983009808
        %v778 = vunpack.c.0.s8 %v777
        %v779 = vperm.slane %v771, %v778
        %v780 = vrot.slane %v775, 4
        %v781 = vsel %vm504, %v780, %v763
        %v782 = vrot.slane %v763, 4
        %v783 = vsel %vm504, %v775, %v782
        %v785 = vunpack.c.l.s4 1934713408
        %v786 = vunpack.c.0.s8 %v785
        %v787 = vperm.slane %v781, %v786
        %v789 = vunpack.c.l.s4 1934713408
        %v790 = vunpack.c.0.s8 %v789
        %v791 = vperm.slane %v783, %v790
        %v792 = vrot.slane %v779, 4
        %v793 = vsel %vm504, %v792, %v767
        %v794 = vrot.slane %v767, 4
        %v795 = vsel %vm504, %v779, %v794
        %v797 = vunpack.c.l.s4 1934713408
        %v798 = vunpack.c.0.s8 %v797
        %v799 = vperm.slane %v793, %v798
        %v801 = vunpack.c.l.s4 1934713408
        %v802 = vunpack.c.0.s8 %v801
        %v803 = vperm.slane %v795, %v802
        %v804 = vrot.slane %v787, 4
        %v805 = vsel %vm504, 0.0, %v804
        %v806 = vrot.slane %v791, 4
        %v807 = vsel %vm504, 0.0, %v806
        %v808 = vrot.slane %v799, 4
        %v809 = vsel %vm504, 0.0, %v808
        %v810 = vrot.slane %v803, 4
        %v811 = vsel %vm504, 0.0, %v810
        %v812 = vsel %vm504, %v806, %v787
        %v814 = vunpack.c.l.s4 1983009808
        %v815 = vunpack.c.0.s8 %v814
        %v816 = vperm.slane %v812, %v815
        %v817 = vrot.slane %v807, 4
        %v818 = vsel %vm504, %v817, %v805
        %v820 = vunpack.c.l.s4 1983009808
        %v821 = vunpack.c.0.s8 %v820
        %v822 = vperm.slane %v818, %v821
        %v823 = vsel %vm504, %v810, %v799
        %v825 = vunpack.c.l.s4 1983009808
        %v826 = vunpack.c.0.s8 %v825
        %v827 = vperm.slane %v823, %v826
        %v828 = vrot.slane %v811, 4
        %v829 = vsel %vm504, %v828, %v809
        %v831 = vunpack.c.l.s4 1983009808
        %v832 = vunpack.c.0.s8 %v831
        %v833 = vperm.slane %v829, %v832
        %v834 = vrot.slane %v822, 4
        %v835 = vsel %vm504, %v834, %v816
        %v836 = vrot.slane %v816, 4
        %v837 = vsel %vm504, %v822, %v836
        %v839 = vunpack.c.l.s4 1934713408
        %v840 = vunpack.c.0.s8 %v839
        %v841 = vperm.slane %v835, %v840
        %v843 = vunpack.c.l.s4 1934713408
        %v844 = vunpack.c.0.s8 %v843
        %v845 = vperm.slane %v837, %v844
        %v846 = vrot.slane %v833, 4
        %v847 = vsel %vm504, %v846, %v827
        %v848 = vrot.slane %v827, 4
        %v849 = vsel %vm504, %v833, %v848
        %v851 = vunpack.c.l.s4 1934713408
        %v852 = vunpack.c.0.s8 %v851
        %v853 = vperm.slane %v847, %v852
        %v855 = vunpack.c.l.s4 1934713408
        %v856 = vunpack.c.0.s8 %v855
        %v857 = vperm.slane %v849, %v856
        %v858 = vrot.slane %v853, 4
        %v859 = vsel %vm504, %v858, %v841
        %v860 = vrot.slane %v841, 4
        %v861 = vsel %vm504, %v853, %v860
        %v862 = vrot.slane %v857, 4
        %v863 = vsel %vm504, %v862, %v845
        %v864 = vrot.slane %v845, 4
        %v865 = vsel %vm504, %v857, %v864
        %v866 = vpack.c.bf16 %v859, %v859
        %v867 = vpack.c.bf16 %v861, %v861
        %v868 = vpack.c.bf16 %v863, %v863
        %v869 = vpack.c.bf16 %v865, %v865
        %vm870 = vcmask 64512
        %v872 = vsel %vm870, %v614, 0
        %v875 = vsel %vm870, %v740, 0
        %877 = vmatpush.bf16.xpose.msra.mxu0 0
        %878 = vmatpush.bf16.xpose.msra.mxu0 0
        %879 = vmatpush.bf16.xpose.msra.mxu0 0
        %880 = vmatpush.bf16.xpose.msra.mxu0 0
        %881 = vmatpush.bf16.xpose.msra.mxu0 0
        %882 = vmatpush.bf16.xpose.msra.mxu0 0
        %883 = vmatpush.bf16.xpose.msra.mxu0 0
        %884 = vmatpush.bf16.xpose.msra.mxu0 %v875
        %885 = vmatmul.bf16.gmra.mxu0 %v872
        %v886 = vpop.f32.mrf.mxu0
        %v887 = vadd.f32 0.0, %v886
        %v888 = vpop.f32.mrf.mxu0
        %889 = vdwg.mxu0
        %v891 = vsel %vm870, %v615, 0
        %v894 = vsel %vm870, %v741, 0
        %896 = vmatpush.bf16.xpose.msra.mxu0 0
        %897 = vmatpush.bf16.xpose.msra.mxu0 0
        %898 = vmatpush.bf16.xpose.msra.mxu0 0
        %899 = vmatpush.bf16.xpose.msra.mxu0 0
        %900 = vmatpush.bf16.xpose.msra.mxu0 0
        %901 = vmatpush.bf16.xpose.msra.mxu0 0
        %902 = vmatpush.bf16.xpose.msra.mxu0 0
        %903 = vmatpush.bf16.xpose.msra.mxu0 %v894
        %904 = vmatmul.bf16.gmra.mxu0 %v891
        %v905 = vpop.f32.mrf.mxu0
        %v906 = vadd.f32 0.0, %v905
        %v907 = vpop.f32.mrf.mxu0
        %908 = vdwg.mxu0
        %v910 = vsel %vm870, %v616, 0
        %v913 = vsel %vm870, %v742, 0
        %915 = vmatpush.bf16.xpose.msra.mxu0 0
        %916 = vmatpush.bf16.xpose.msra.mxu0 0
        %917 = vmatpush.bf16.xpose.msra.mxu0 0
        %918 = vmatpush.bf16.xpose.msra.mxu0 0
        %919 = vmatpush.bf16.xpose.msra.mxu0 0
        %920 = vmatpush.bf16.xpose.msra.mxu0 0
        %921 = vmatpush.bf16.xpose.msra.mxu0 0
        %922 = vmatpush.bf16.xpose.msra.mxu0 %v913
        %923 = vmatmul.bf16.gmra.mxu0 %v910
        %v924 = vpop.f32.mrf.mxu0
        %v925 = vadd.f32 0.0, %v924
        %v926 = vpop.f32.mrf.mxu0
        %927 = vdwg.mxu0
        %v929 = vsel %vm870, %v617, 0
        %v932 = vsel %vm870, %v743, 0
        %934 = vmatpush.bf16.xpose.msra.mxu0 0
        %935 = vmatpush.bf16.xpose.msra.mxu0 0
        %936 = vmatpush.bf16.xpose.msra.mxu0 0
        %937 = vmatpush.bf16.xpose.msra.mxu0 0
        %938 = vmatpush.bf16.xpose.msra.mxu0 0
        %939 = vmatpush.bf16.xpose.msra.mxu0 0
        %940 = vmatpush.bf16.xpose.msra.mxu0 0
        %941 = vmatpush.bf16.xpose.msra.mxu0 %v932
        %942 = vmatmul.bf16.gmra.mxu0 %v929
        %v943 = vpop.f32.mrf.mxu0
        %v944 = vadd.f32 0.0, %v943
        %v945 = vpop.f32.mrf.mxu0
        %946 = vdwg.mxu0
        %v947 = vsel %vm870, %v887, -inf
        %948 = vmax.xlane.f32.xlu0 %v947
        %v949 = vpop.xlane.xlu0 %948
        %v950 = vsel %vm870, %v906, -inf
        %951 = vmax.xlane.f32.xlu0 %v950
        %v952 = vpop.xlane.xlu0 %951
        %v953 = vsel %vm870, %v925, -inf
        %954 = vmax.xlane.f32.xlu0 %v953
        %v955 = vpop.xlane.xlu0 %954
        %v956 = vsel %vm870, %v944, -inf
        %957 = vmax.xlane.f32.xlu0 %v956
        %v958 = vpop.xlane.xlu0 %957
        %v959 = vsub.f32 %v887, %v949
        %v960 = vsub.f32 %v906, %v952
        %v961 = vsub.f32 %v925, %v955
        %v962 = vsub.f32 %v944, %v958
        %v963 = vmul.f32 %v959, 1.442695
        %v964 = vpow.pop %v963
        %v965 = vmul.f32 %v960, 1.442695
        %v966 = vpow.pop %v965
        %v967 = vmul.f32 %v961, 1.442695
        %v968 = vpow.pop %v967
        %v969 = vmul.f32 %v962, 1.442695
        %v970 = vpow.pop %v969
        %v971 = vsel %vm870, %v964, 0.0
        %972 = vadd.xlane.f32.xlu0 %v971
        %v973 = vpop.xlane.xlu0 %972
        %v974 = vsel %vm870, %v966, 0.0
        %975 = vadd.xlane.f32.xlu0 %v974
        %v976 = vpop.xlane.xlu0 %975
        %v977 = vsel %vm870, %v968, 0.0
        %978 = vadd.xlane.f32.xlu0 %v977
        %v979 = vpop.xlane.xlu0 %978
        %v980 = vsel %vm870, %v970, 0.0
        %981 = vadd.xlane.f32.xlu0 %v980
        %v982 = vpop.xlane.xlu0 %981
        %v983 = vrcp.pop %v973
        %v984 = vrcp.pop %v976
        %v985 = vrcp.pop %v979
        %v986 = vrcp.pop %v982
        %v987 = vmul.f32 %v964, %v983
        %v988 = vmul.f32 %v966, %v984
        %v989 = vmul.f32 %v968, %v985
        %v990 = vmul.f32 %v970, %v986
        %v991 = vpack.c.bf16 %v987, %v987
        %v992 = vpack.c.bf16 %v988, %v988
        %v993 = vpack.c.bf16 %v989, %v989
        %v994 = vpack.c.bf16 %v990, %v990
        %v996 = vsel %vm870, %v991, 0
        %vm998 = vcmask 1043456
        %v1000 = vsel %vm998, %v866, 0
        %1002 = vmatpush.bf16.msra.mxu0 0
        %1003 = vmatpush.bf16.msra.mxu0 0
        %1004 = vmatpush.bf16.msra.mxu0 0
        %1005 = vmatpush.bf16.msra.mxu0 0
        %1006 = vmatpush.bf16.msra.mxu0 0
        %1007 = vmatpush.bf16.msra.mxu0 0
        %1008 = vmatpush.bf16.msra.mxu0 0
        %1009 = vmatpush.bf16.msra.mxu0 %v1000
        %1010 = vmatmul.bf16.gmra.mxu0 %v996
        %v1011 = vpop.f32.mrf.mxu0
        %v1012 = vadd.f32 0.0, %v1011
        %v1013 = vpop.f32.mrf.mxu0
        %1014 = vdwg.mxu0
        %v1016 = vsel %vm870, %v992, 0
        %v1019 = vsel %vm998, %v867, 0
        %1021 = vmatpush.bf16.msra.mxu0 0
        %1022 = vmatpush.bf16.msra.mxu0 0
        %1023 = vmatpush.bf16.msra.mxu0 0
        %1024 = vmatpush.bf16.msra.mxu0 0
        %1025 = vmatpush.bf16.msra.mxu0 0
        %1026 = vmatpush.bf16.msra.mxu0 0
        %1027 = vmatpush.bf16.msra.mxu0 0
        %1028 = vmatpush.bf16.msra.mxu0 %v1019
        %1029 = vmatmul.bf16.gmra.mxu0 %v1016
        %v1030 = vpop.f32.mrf.mxu0
        %v1031 = vadd.f32 0.0, %v1030
        %v1032 = vpop.f32.mrf.mxu0
        %1033 = vdwg.mxu0
        %v1035 = vsel %vm870, %v993, 0
        %v1038 = vsel %vm998, %v868, 0
        %1040 = vmatpush.bf16.msra.mxu0 0
        %1041 = vmatpush.bf16.msra.mxu0 0
        %1042 = vmatpush.bf16.msra.mxu0 0
        %1043 = vmatpush.bf16.msra.mxu0 0
        %1044 = vmatpush.bf16.msra.mxu0 0
        %1045 = vmatpush.bf16.msra.mxu0 0
        %1046 = vmatpush.bf16.msra.mxu0 0
        %1047 = vmatpush.bf16.msra.mxu0 %v1038
        %1048 = vmatmul.bf16.gmra.mxu0 %v1035
        %v1049 = vpop.f32.mrf.mxu0
        %v1050 = vadd.f32 0.0, %v1049
        %v1051 = vpop.f32.mrf.mxu0
        %1052 = vdwg.mxu0
        %v1054 = vsel %vm870, %v994, 0
        %v1057 = vsel %vm998, %v869, 0
        %1059 = vmatpush.bf16.msra.mxu0 0
        %1060 = vmatpush.bf16.msra.mxu0 0
        %1061 = vmatpush.bf16.msra.mxu0 0
        %1062 = vmatpush.bf16.msra.mxu0 0
        %1063 = vmatpush.bf16.msra.mxu0 0
        %1064 = vmatpush.bf16.msra.mxu0 0
        %1065 = vmatpush.bf16.msra.mxu0 0
        %1066 = vmatpush.bf16.msra.mxu0 %v1057
        %1067 = vmatmul.bf16.gmra.mxu0 %v1054
        %v1068 = vpop.f32.mrf.mxu0
        %v1069 = vadd.f32 0.0, %v1068
        %v1070 = vpop.f32.mrf.mxu0
        %1071 = vdwg.mxu0
        %v1072 = vrot.slane %v1050, 4
        %v1073 = vsel %vm504, %v1072, %v1012
        %v1074 = vrot.slane %v1012, 4
        %v1075 = vsel %vm504, %v1050, %v1074
        %v1077 = vunpack.c.l.s4 1983009808
        %v1078 = vunpack.c.0.s8 %v1077
        %v1079 = vperm.slane %v1073, %v1078
        %v1081 = vunpack.c.l.s4 1983009808
        %v1082 = vunpack.c.0.s8 %v1081
        %v1083 = vperm.slane %v1075, %v1082
        %v1084 = vrot.slane %v1069, 4
        %v1085 = vsel %vm504, %v1084, %v1031
        %v1086 = vrot.slane %v1031, 4
        %v1087 = vsel %vm504, %v1069, %v1086
        %v1089 = vunpack.c.l.s4 1983009808
        %v1090 = vunpack.c.0.s8 %v1089
        %v1091 = vperm.slane %v1085, %v1090
        %v1093 = vunpack.c.l.s4 1983009808
        %v1094 = vunpack.c.0.s8 %v1093
        %v1095 = vperm.slane %v1087, %v1094
        %v1096 = vrot.slane %v1091, 4
        %v1097 = vsel %vm504, %v1096, %v1079
        %v1098 = vrot.slane %v1079, 4
        %v1099 = vsel %vm504, %v1091, %v1098
        %v1101 = vunpack.c.l.s4 1934713408
        %v1102 = vunpack.c.0.s8 %v1101
        %v1103 = vperm.slane %v1097, %v1102
        %v1105 = vunpack.c.l.s4 1934713408
        %v1106 = vunpack.c.0.s8 %v1105
        %v1107 = vperm.slane %v1099, %v1106
        %v1108 = vrot.slane %v1095, 4
        %v1109 = vsel %vm504, %v1108, %v1083
        %v1110 = vrot.slane %v1083, 4
        %v1111 = vsel %vm504, %v1095, %v1110
        %v1113 = vunpack.c.l.s4 1934713408
        %v1114 = vunpack.c.0.s8 %v1113
        %v1115 = vperm.slane %v1109, %v1114
        %v1117 = vunpack.c.l.s4 1934713408
        %v1118 = vunpack.c.0.s8 %v1117
        %v1119 = vperm.slane %v1111, %v1118
        %v1120 = vrot.slane %v1103, 4
        %v1121 = vsel %vm504, 0.0, %v1120
        %v1122 = vrot.slane %v1107, 4
        %v1123 = vsel %vm504, 0.0, %v1122
        %v1124 = vrot.slane %v1115, 4
        %v1125 = vsel %vm504, 0.0, %v1124
        %v1126 = vrot.slane %v1119, 4
        %v1127 = vsel %vm504, 0.0, %v1126
        %v1128 = vsel %vm504, %v1122, %v1103
        %v1130 = vunpack.c.l.s4 1983009808
        %v1131 = vunpack.c.0.s8 %v1130
        %v1132 = vperm.slane %v1128, %v1131
        %v1133 = vrot.slane %v1123, 4
        %v1134 = vsel %vm504, %v1133, %v1121
        %v1136 = vunpack.c.l.s4 1983009808
        %v1137 = vunpack.c.0.s8 %v1136
        %v1138 = vperm.slane %v1134, %v1137
        %v1139 = vsel %vm504, %v1126, %v1115
        %v1141 = vunpack.c.l.s4 1983009808
        %v1142 = vunpack.c.0.s8 %v1141
        %v1143 = vperm.slane %v1139, %v1142
        %v1144 = vrot.slane %v1127, 4
        %v1145 = vsel %vm504, %v1144, %v1125
        %v1147 = vunpack.c.l.s4 1983009808
        %v1148 = vunpack.c.0.s8 %v1147
        %v1149 = vperm.slane %v1145, %v1148
        %v1150 = vrot.slane %v1138, 4
        %v1151 = vsel %vm504, %v1150, %v1132
        %v1152 = vrot.slane %v1132, 4
        %v1153 = vsel %vm504, %v1138, %v1152
        %v1155 = vunpack.c.l.s4 1934713408
        %v1156 = vunpack.c.0.s8 %v1155
        %v1157 = vperm.slane %v1151, %v1156
        %v1159 = vunpack.c.l.s4 1934713408
        %v1160 = vunpack.c.0.s8 %v1159
        %v1161 = vperm.slane %v1153, %v1160
        %v1162 = vrot.slane %v1149, 4
        %v1163 = vsel %vm504, %v1162, %v1143
        %v1164 = vrot.slane %v1143, 4
        %v1165 = vsel %vm504, %v1149, %v1164
        %v1167 = vunpack.c.l.s4 1934713408
        %v1168 = vunpack.c.0.s8 %v1167
        %v1169 = vperm.slane %v1163, %v1168
        %v1171 = vunpack.c.l.s4 1934713408
        %v1172 = vunpack.c.0.s8 %v1171
        %v1173 = vperm.slane %v1165, %v1172
        %v1174 = vrot.slane %v1169, 4
        %v1175 = vsel %vm504, %v1174, %v1157
        %v1176 = vrot.slane %v1157, 4
        %v1177 = vsel %vm504, %v1169, %v1176
        %v1178 = vrot.slane %v1173, 4
        %v1179 = vsel %vm504, %v1178, %v1161
        %v1180 = vrot.slane %v1161, 4
        %v1181 = vsel %vm504, %v1173, %v1180
        %1183 = vrot.lane.b32.xlu0 %v1177, 8
        %v1184 = vpop.permute.xlu0 %1183
        %1187 = vrot.lane.b32.xlu0 %v1179, 16
        %v1188 = vpop.permute.xlu0 %1187
        %1191 = vrot.lane.b32.xlu0 %v1181, 24
        %v1192 = vpop.permute.xlu0 %1191
        %v1194 = vsel %vm870, %v1175, %v1184
        %vm1195 = vcmask 130048
        %v1196 = vsel %vm1195, %v1194, %v1188
        %vm1197 = vcmask 195584
        %v1198 = vsel %vm1197, %v1196, %v1192
        %v1199 = vpack.c.bf16 %v1198, %v1198
        %v1200 = vld [vmem:[%s3] sm:$0xf]
        %v1201 = vld [vmem:[%s3 + $0x4] sm:$0xf]
        %v1202 = vld [vmem:[%s3 + $0x8] sm:$0xf]
        %v1203 = vld [vmem:[%s3 + $0xc] sm:$0xf]
        %v1204 = vld [vmem:[%s4] sm:$0x1]
        %v1206 = vperm.slane %v1204, 0
        %v1212 = vunpack.c.l.b16 %v1200
        %v1213 = vunpack.c.l.b16 %v1201
        %v1214 = vunpack.c.l.b16 %v1202
        %v1215 = vunpack.c.l.b16 %v1203
        %v1216 = vpack.c.b16 %v1213, %v1212
        %v1217 = vpack.c.b16 %v1215, %v1214
        %v1221 = vsel %vm476, %v1199, 0
        %1223 = vmatpush.bf16.msra.mxu0 0
        %1224 = vmatpush.bf16.msra.mxu0 0
        %1225 = vmatpush.bf16.msra.mxu0 0
        %1226 = vmatpush.bf16.msra.mxu0 0
        %1227 = vmatpush.bf16.msra.mxu0 0
        %1228 = vmatpush.bf16.msra.mxu0 0
        %1229 = vmatpush.bf16.msra.mxu0 %v1217
        %1230 = vmatpush.bf16.msra.mxu0 %v1216
        %1231 = vmatmul.bf16.gmra.mxu0 %v1221
        %v1232 = vpop.f32.mrf.mxu0
        %v1233 = vadd.f32 %v1206, %v1232
        %v1234 = vpop.f32.mrf.mxu0
        %1235 = vdwg.mxu0
        %v1236 = vadd.f32 %v454, %v1233
        %v1237 = vld [vmem:[%s5] sm:$0x1]
        %v1238 = vld [vmem:[%s6] sm:$0x1]
        %v1239 = vsel %vm476, %v1236, 0.0
        %1240 = vadd.xlane.f32.xlu0 %v1239
        %v1241 = vpop.xlane.xlu0 %1240
        %v1242 = vrcp.pop 32.0
        %v1243 = vmul.f32 32.0, %v1242
        %v1244 = vsub.f32 1.0, %v1243
        %v1245 = vmul.f32 %v1242, %v1244
        %v1246 = vadd.f32 %v1242, %v1245
        %vm1247 = vweird.f32 %v1242
        %v1248 = vsel %vm1247, %v1242, %v1246
        %v1249 = vmul.f32 %v1241, %v1248
        %v1250 = vsub.f32 %v1236, %v1249
        %v1251 = vmul.f32 %v1250, %v1250
        %v1252 = vsel %vm476, %v1251, 0.0
        %1253 = vadd.xlane.f32.xlu0 %v1252
        %v1254 = vpop.xlane.xlu0 %1253
        %v1255 = vmul.f32 %v1254, %v1248
        %v1256 = vadd.f32 %v1255, 1e-05
        %v1257 = vrsqrt.pop %v1256
        %v1258 = vmul.f32 %v1257, %v1256
        %v1259 = vmul.f32 %v1258, %v1257
        %v1260 = vmul.f32 0.5, %v1259
        %v1261 = vsub.f32 1.5, %v1260
        %v1262 = vmul.f32 %v1257, %v1261
        %vm1263 = vweird.f32 %v1256
        %vm1264 = vweird.f32 %v1257
        %vm1265 = vmor %vm1263, %vm1264
        %v1266 = vsel %vm1265, %v1257, %v1262
        %v1267 = vmul.f32 %v1250, %v1266
        %v1269 = vperm.slane %v1237, 0
        %v1271 = vmul.f32 %v1267, %v1269
        %v1273 = vperm.slane %v1238, 0
        %v1275 = vadd.f32 %v1271, %v1273
        %v1276 = vpack.c.bf16 %v1275, %v1275
        %v1277 = vld [vmem:[#allocation2] sm:$0xf]
        %v1278 = vld [vmem:[#allocation2 + $0x4] sm:$0xf]
        %v1279 = vld [vmem:[#allocation2 + $0x8] sm:$0xf]
        %v1280 = vld [vmem:[#allocation2 + $0xc] sm:$0xf]
        %v1281 = vld [vmem:[%s8] sm:$0x1]
        %v1283 = vperm.slane %v1281, 0
        %v1289 = vunpack.c.l.b16 %v1277
        %v1290 = vunpack.c.l.b16 %v1278
        %v1291 = vunpack.c.l.b16 %v1279
        %v1292 = vunpack.c.l.b16 %v1280
        %v1293 = vpack.c.b16 %v1290, %v1289
        %v1294 = vpack.c.b16 %v1292, %v1291
        %v1298 = vsel %vm476, %v1276, 0
        %1300 = vmatpush.bf16.msra.mxu0 0
        %1301 = vmatpush.bf16.msra.mxu0 0
        %1302 = vmatpush.bf16.msra.mxu0 0
        %1303 = vmatpush.bf16.msra.mxu0 0
        %1304 = vmatpush.bf16.msra.mxu0 0
        %1305 = vmatpush.bf16.msra.mxu0 0
        %1306 = vmatpush.bf16.msra.mxu0 %v1294
        %1307 = vmatpush.bf16.msra.mxu0 %v1293
        %1308 = vmatmul.bf16.gmra.mxu0 %v1298
        %v1309 = vpop.f32.mrf.mxu0
        %v1310 = vadd.f32 %v1283, %v1309
        %v1311 = vpop.f32.mrf.mxu0
        %1312 = vdwg.mxu0
        %v1313 = vmax.f32 %v1310, 0.0
        %v1314 = vpack.c.bf16 %v1313, %v1313
        %v1315 = vld [vmem:[%s9] sm:$0xf]
        %v1316 = vld [vmem:[%s9 + $0x4] sm:$0xf]
        %v1317 = vld [vmem:[%s9 + $0x8] sm:$0xf]
        %v1318 = vld [vmem:[%s9 + $0xc] sm:$0xf]
        %v1319 = vld [vmem:[%s9 + $0x10] sm:$0xf]
        %v1320 = vld [vmem:[%s9 + $0x14] sm:$0xf]
        %v1321 = vld [vmem:[%s9 + $0x18] sm:$0xf]
        %v1322 = vld [vmem:[%s9 + $0x1c] sm:$0xf]
        %v1323 = vld [vmem:[%s10] sm:$0x1]
        %v1325 = vperm.slane %v1323, 0
        %v1335 = vunpack.c.l.b16 %v1315
        %v1336 = vunpack.c.l.b16 %v1316
        %v1337 = vunpack.c.l.b16 %v1317
        %v1338 = vunpack.c.l.b16 %v1318
        %v1339 = vunpack.c.l.b16 %v1319
        %v1340 = vunpack.c.l.b16 %v1320
        %v1341 = vunpack.c.l.b16 %v1321
        %v1342 = vunpack.c.l.b16 %v1322
        %v1343 = vpack.c.b16 %v1336, %v1335
        %v1344 = vpack.c.b16 %v1338, %v1337
        %v1345 = vpack.c.b16 %v1340, %v1339
        %v1346 = vpack.c.b16 %v1342, %v1341
        %vm1351 = vcmask 523264
        %v1353 = vsel %vm1351, %v1314, 0
        %1355 = vmatpush.bf16.msra.mxu0 0
        %1356 = vmatpush.bf16.msra.mxu0 0
        %1357 = vmatpush.bf16.msra.mxu0 0
        %1358 = vmatpush.bf16.msra.mxu0 0
        %1359 = vmatpush.bf16.msra.mxu0 %v1346
        %1360 = vmatpush.bf16.msra.mxu0 %v1345
        %1361 = vmatpush.bf16.msra.mxu0 %v1344
        %1362 = vmatpush.bf16.msra.mxu0 %v1343
        %1363 = vmatmul.bf16.gmra.mxu0 %v1353
        %v1364 = vpop.f32.mrf.mxu0
        %v1365 = vadd.f32 %v1325, %v1364
        %v1366 = vpop.f32.mrf.mxu0
        %1367 = vdwg.mxu0
        %v1368 = vadd.f32 %v1275, %v1365
        %v1369 = vld [vmem:[%s11] sm:$0x1]
        %v1370 = vld [vmem:[%s12] sm:$0x1]
        %v1371 = vsel %vm476, %v1368, 0.0
        %1372 = vadd.xlane.f32.xlu0 %v1371
        %v1373 = vpop.xlane.xlu0 %1372
        %v1374 = vmul.f32 %v1373, %v1248
        %v1375 = vsub.f32 %v1368, %v1374
        %v1376 = vmul.f32 %v1375, %v1375
        %v1377 = vsel %vm476, %v1376, 0.0
        %1378 = vadd.xlane.f32.xlu0 %v1377
        %v1379 = vpop.xlane.xlu0 %1378
        %v1380 = vmul.f32 %v1379, %v1248
        %v1381 = vadd.f32 %v1380, 1e-05
        %v1382 = vrsqrt.pop %v1381
        %v1383 = vmul.f32 %v1382, %v1381
        %v1384 = vmul.f32 %v1383, %v1382
        %v1385 = vmul.f32 0.5, %v1384
        %v1386 = vsub.f32 1.5, %v1385
        %v1387 = vmul.f32 %v1382, %v1386
        %vm1388 = vweird.f32 %v1381
        %vm1389 = vweird.f32 %v1382
        %vm1390 = vmor %vm1388, %vm1389
        %v1391 = vsel %vm1390, %v1382, %v1387
        %v1392 = vmul.f32 %v1375, %v1391
        %v1394 = vperm.slane %v1369, 0
        %v1396 = vmul.f32 %v1392, %v1394
        %v1398 = vperm.slane %v1370, 0
        %v1400 = vadd.f32 %v1396, %v1398
        %1401 = vst.msk [vmem:[%s448] sm:$0xff] %vm476, %v1400
        %s1402 = sand.u32 %s314, 1
        %s1403 = scalar_lea.sflag [#allocation4], %s1402
        %s1404 = sand.u32 %s314, 1
        %s1405 = smul.addr %s1404, 8
        %s1406 = scalar_lea.vmem [#allocation5], %s1405
        // Predicated region
        $region77: #{tpu_custom_call.1} parent=71 // pred_check
          %p1407 = pneg %p324
        $region78: #{tpu_custom_call.1} parent=71 // pred_check_branch
          %1409 = sbr.rel (%p1407) target = $region80
        $region79: #{tpu_custom_call.1} parent=71 // pred_region
          %1411 = vsyncadd %s1403, 0
          %s1412 = smul.addr %s28, 8
          %s1413 = scalar_lea.hbm %s13, %s1412
          %s1415 = sshll.u32 %s1406, 4
          %s1416 = int_to_ptr.vmem [resolvable:$true] %s1415
          %s1417 = sshll.u32 %s1413, 4
          %s1418 = int_to_ptr.hbm [resolvable:$true] %s1417
          %1420 = dma.vmem_to_hbm [thread:$0]  %s1416, 128, %s1418, %s1403
        $region80: #{tpu_custom_call.1} parent=71 // pred_fallthru
          _
      $region72: #{tpu_custom_call.1} parent=5 // pred_fallthru
        _
      %p1421 = scmp.le.s32.totalorder 2, %s23
      // Predicated region
      $region81: #{tpu_custom_call.1} parent=5 // pred_check
        %p1422 = pneg %p1421
      $region82: #{tpu_custom_call.1} parent=5 // pred_check_branch
        %1424 = sbr.rel (%p1422) target = $region84
      $region83: #{tpu_custom_call.1} parent=5 // pred_region
        %s1425 = ssub.s32 %s23, 2
        // Predicated region
        $region85: #{tpu_custom_call.1} parent=83 // pred_check
          %p1426 = pneg %p330
        $region86: #{tpu_custom_call.1} parent=83 // pred_check_branch
          %1428 = sbr.rel (%p1426) target = $region88
        $region87: #{tpu_custom_call.1} parent=83 // pred_region
          %s1429 = sand.u32 %s315, 1
          %s1430 = scalar_lea.sflag [#allocation4], %s1429
          %s1431 = sand.u32 %s315, 1
          %s1432 = smul.addr %s1431, 8
          %s1433 = scalar_lea.vmem [#allocation5], %s1432
          %1435 = dma.done %s1430, 128
        $region88: #{tpu_custom_call.1} parent=83 // pred_fallthru
          _
      $region84: #{tpu_custom_call.1} parent=5 // pred_fallthru
        _
    $region6: #{tpu_custom_call.1} parent=1 // loop_footer
      %s27 = sadd.s32 1, %s23
    $region7: #{tpu_custom_call.1} parent=1 // loop_footer_branch
      %22 = sbr.rel target = $region3
    $region8: #{tpu_custom_call.1} parent=1 // loop_exit
      _
    %1436 = vsyncpa [#allocation3], 1
    %s1437 = scalar_lea.sflag [#allocation3], 1
    %1438 = vsyncpa %s1437, 1
    %1439 = vsyncpa [#allocation4], 1
    %s1440 = scalar_lea.sflag [#allocation4], 1
    %1441 = vsyncpa %s1440, 1

</llo_original>
